<compile_context>
chip_gen: v6e
topology: v6e:2x2x1
jax: 0.10.0
libtpu: 0.0.40
codegen_flags: <defaults>
</compile_context>

<pallas_src>
import functools

import jax
import jax.numpy as jnp
from jax.experimental import pallas as pl
from jax.experimental.pallas import tpu as pltpu


def _round_up(x, m):
    return (x + m - 1) // m * m


def actor_dense_kernel(x_ref, w1_ref, b1_ref, w2_ref, b2_ref, w3_ref, b3_ref,
                       out_ref, *, max_action):
    # Layer 1: Linear(F -> H1pad) + ReLU. bf16 operands on the MXU, f32 acc,
    # epilogue in f32.
    h1 = jnp.dot(x_ref[...], w1_ref[...], preferred_element_type=jnp.float32)
    h1 = jnp.maximum(h1 + b1_ref[...], 0.0)

    # Layer 2: Linear(H1pad -> H2pad) + ReLU.
    h2 = jnp.dot(h1.astype(jnp.bfloat16), w2_ref[...],
                 preferred_element_type=jnp.float32)
    h2 = jnp.maximum(h2 + b2_ref[...], 0.0)

    # Layer 3: Linear(H2pad -> A_pad), then max_action * tanh (tanh on EUP).
    # max_action cannot be folded into w3/b3 (tanh is nonlinear); the extra
    # vmul is free relative to the MXU/DMA bound.
    h3 = jnp.dot(h2.astype(jnp.bfloat16), w3_ref[...],
                 preferred_element_type=jnp.float32)
    h3 = h3 + b3_ref[...]
    out_ref[...] = (max_action * jnp.tanh(h3)).astype(out_ref.dtype)


def actor_dense_forward(x_nchw, padded_params, *, max_action, action_dim,
                        batch_tile=1024):
    """x_nchw: (B, ...) float array. Returns (B, action_dim) float32."""
    B = x_nchw.shape[0]
    # Flatten state dims (as the torch Linear expects) and cast to bf16. Under
    # jit this cast fuses with the flatten/pad pass; ideally the producer of x
    # emits bf16 directly so the kernel's streaming x DMA is half-width.
    x = x_nchw.reshape(B, -1).astype(jnp.bfloat16)
    F = x.shape[1]

    w1, b1, w2, b2, w3, b3 = padded_params
    F_pad, H1 = w1.shape
    H2 = w2.shape[1]
    A_pad = w3.shape[1]

    # Pad feature dim to match padded w1 rows (zeros are inert). No-op when
    # F is already a multiple of 128.
    if F_pad != F:
        x = jnp.pad(x, ((0, 0), (0, F_pad - F)))

    # Batch tile: multiple of 16 (bf16 sublane packing; also satisfies the f32
    # output's 8-sublane rule), capped at batch_tile. No batch padding: the
    # boundary block is partial; its undefined rows are row-independent and
    # masked away on the output store.
    tb = min(batch_tile, _round_up(B, 16))
    grid = (pl.cdiv(B, tb),)

    kernel = functools.partial(actor_dense_kernel, max_action=float(max_action))

    out_pad = pl.pallas_call(
        kernel,
        out_shape=jax.ShapeDtypeStruct((B, A_pad), jnp.float32),
        grid_spec=pl.GridSpec(
            grid=grid,
            in_specs=[
                pl.BlockSpec((tb, F_pad), lambda i: (i, 0)),    # x tile (pipelined)
                pl.BlockSpec((F_pad, H1), lambda i: (0, 0)),    # weights: VMEM-resident
                pl.BlockSpec((1, H1), lambda i: (0, 0)),
                pl.BlockSpec((H1, H2), lambda i: (0, 0)),
                pl.BlockSpec((1, H2), lambda i: (0, 0)),
                pl.BlockSpec((H2, A_pad), lambda i: (0, 0)),
                pl.BlockSpec((1, A_pad), lambda i: (0, 0)),
            ],
            out_specs=pl.BlockSpec((tb, A_pad), lambda i: (i, 0)),
        ),
        compiler_params=pltpu.CompilerParams(
            # Batch axis is embarrassingly parallel -> v7x megacore split.
            dimension_semantics=("parallel",),
        ),
    )(x, w1, b1, w2, b2, w3, b3)

    # Keep the 128-wide (lane-dense) output inside the kernel; slice the padded
    # action columns off on the host.
    return out_pad[:, :action_dim]


def init_params(key, state_dim_flat, action_dim):
    """Deterministic synthetic init; returns (padded bf16/f32 params, unpadded f32 params)."""
    H1, H2 = 400, 300
    F_pad = _round_up(state_dim_flat, 128)
    H1_pad = _round_up(H1, 128)      # 512
    H2_pad = _round_up(H2, 128)      # 384
    A_pad = _round_up(action_dim, 128)

    ks = jax.random.split(key, 6)
    s1 = 1.0 / jnp.sqrt(float(state_dim_flat))
    s2 = 1.0 / jnp.sqrt(400.0)
    s3 = 1.0 / jnp.sqrt(300.0)

    # Weights stored (in, out) so the kernel computes x @ W + b
    # (== torch Linear with W_torch = W.T); biases (1, out) for 2D broadcast.
    w1 = jax.random.uniform(ks[0], (state_dim_flat, H1), jnp.float32, -s1, s1)
    b1 = jax.random.uniform(ks[1], (1, H1), jnp.float32, -s1, s1)
    w2 = jax.random.uniform(ks[2], (H1, H2), jnp.float32, -s2, s2)
    b2 = jax.random.uniform(ks[3], (1, H2), jnp.float32, -s2, s2)
    w3 = jax.random.uniform(ks[4], (H2, action_dim), jnp.float32, -s3, s3)
    b3 = jax.random.uniform(ks[5], (1, action_dim), jnp.float32, -s3, s3)

    def pad2(a, r, c):
        return jnp.pad(a, ((0, r - a.shape[0]), (0, c - a.shape[1])))

    padded = (
        pad2(w1, F_pad, H1_pad).astype(jnp.bfloat16),
        pad2(b1, 1, H1_pad),                            # biases stay f32
        pad2(w2, H1_pad, H2_pad).astype(jnp.bfloat16),
        pad2(b2, 1, H2_pad),
        pad2(w3, H2_pad, A_pad).astype(jnp.bfloat16),
        pad2(b3, 1, A_pad),
    )
    unpadded = (w1, b1, w2, b2, w3, b3)
    return padded, unpadded


if __name__ == "__main__":
    key = jax.random.PRNGKey(0)
    k_x, k_p = jax.random.split(key)

    # state_dim = (4, 16, 16) -> flattened 1024; batch=2; action_dim=4
    B, C, H, W = 2, 4, 16, 16
    action_dim = 4
    max_action = 1.0

    x = jax.random.normal(k_x, (B, C, H, W), dtype=jnp.float32)
    padded, unpadded = init_params(k_p, C * H * W, action_dim)

    fwd = jax.jit(functools.partial(actor_dense_forward,
                                    max_action=max_action,
                                    action_dim=action_dim))
    out = jax.block_until_ready(fwd(x, padded))
    assert out.shape == (B, action_dim)

    xf = x.reshape(B, -1)

    # Reference 1: same bf16 pipeline as the kernel (tight tolerance).
    w1p, b1p, w2p, b2p, w3p, b3p = padded
    xp = xf.astype(jnp.bfloat16)
    if w1p.shape[0] != xp.shape[1]:
        xp = jnp.pad(xp, ((0, 0), (0, w1p.shape[0] - xp.shape[1])))
    r = jnp.maximum(jnp.dot(xp, w1p,
                            preferred_element_type=jnp.float32) + b1p, 0.0)
    r = jnp.maximum(jnp.dot(r.astype(jnp.bfloat16), w2p,
                            preferred_element_type=jnp.float32) + b2p, 0.0)
    r = max_action * jnp.tanh(jnp.dot(r.astype(jnp.bfloat16), w3p,
                                      preferred_element_type=jnp.float32) + b3p)
    ref_bf16 = r[:, :action_dim]
    assert jnp.allclose(out, ref_bf16, atol=2e-3, rtol=2e-3)

    # Reference 2: original full-f32 module semantics (loose tolerance: bf16
    # weights + bf16 x quantization).
    w1, b1, w2, b2, w3, b3 = unpadded
    rf = jnp.maximum(xf @ w1 + b1, 0.0)
    rf = jnp.maximum(rf @ w2 + b2, 0.0)
    rf = max_action * jnp.tanh(rf @ w3 + b3)
    assert jnp.allclose(out, rf, atol=5e-2, rtol=5e-2)

    print("KERNEL_OK")
</pallas_src>

<mosaic_0001>
module attributes {stable_mosaic.version = 11 : i64} {
  func.func @actor_dense_kernel(%arg0: i32, %arg1: memref<16x1024xbf16, #tpu.memory_space<vmem>>, %arg2: memref<1024x512xbf16, #tpu.memory_space<vmem>>, %arg3: memref<1x512xf32, #tpu.memory_space<vmem>>, %arg4: memref<512x384xbf16, #tpu.memory_space<vmem>>, %arg5: memref<1x384xf32, #tpu.memory_space<vmem>>, %arg6: memref<384x128xbf16, #tpu.memory_space<vmem>>, %arg7: memref<1x128xf32, #tpu.memory_space<vmem>>, %arg8: memref<16x128xf32, #tpu.memory_space<vmem>>) attributes {dimension_semantics = [#tpu.dimension_semantics<parallel>], iteration_bounds = array<i64: 1>, scalar_prefetch = 0 : i64, scratch_operands = 0 : i64, tpu.core_type = #tpu.core_type<tc>, window_params = [{transform_indices = @transform_0, window_bounds = array<i64: 16, 1024>}, {pipeline_mode = #tpu.pipeline_mode<synchronous>, transform_indices = @transform_1, window_bounds = array<i64: 1024, 512>}, {pipeline_mode = #tpu.pipeline_mode<synchronous>, transform_indices = @transform_2, window_bounds = array<i64: 1, 512>}, {pipeline_mode = #tpu.pipeline_mode<synchronous>, transform_indices = @transform_3, window_bounds = array<i64: 512, 384>}, {pipeline_mode = #tpu.pipeline_mode<synchronous>, transform_indices = @transform_4, window_bounds = array<i64: 1, 384>}, {pipeline_mode = #tpu.pipeline_mode<synchronous>, transform_indices = @transform_5, window_bounds = array<i64: 384, 128>}, {pipeline_mode = #tpu.pipeline_mode<synchronous>, transform_indices = @transform_6, window_bounds = array<i64: 1, 128>}, {transform_indices = @transform_7, window_bounds = array<i64: 16, 128>}]} {
    %c0 = arith.constant 0 : index
    %c0_0 = arith.constant 0 : index
    %0 = vector.load %arg1[%c0, %c0_0] : memref<16x1024xbf16, #tpu.memory_space<vmem>>, vector<16x1024xbf16>
    %c0_1 = arith.constant 0 : index
    %c0_2 = arith.constant 0 : index
    %1 = vector.load %arg2[%c0_1, %c0_2] : memref<1024x512xbf16, #tpu.memory_space<vmem>>, vector<1024x512xbf16>
    %cst = arith.constant dense<0.000000e+00> : vector<16x512xf32>
    %2 = tpu.matmul %0, %1, %cst {dimension_numbers = #tpu.dot_dimension_numbers<[1], [0], [0], [1], [0, 0, 1, 1], [], []>} : vector<16x1024xbf16>, vector<1024x512xbf16>, vector<16x512xf32> -> vector<16x512xf32>
    %c0_3 = arith.constant 0 : index
    %c0_4 = arith.constant 0 : index
    %3 = vector.load %arg3[%c0_3, %c0_4] : memref<1x512xf32, #tpu.memory_space<vmem>>, vector<1x512xf32>
    %4 = vector.broadcast %3 : vector<1x512xf32> to vector<16x512xf32>
    %5 = arith.addf %2, %4 : vector<16x512xf32>
    %cst_5 = arith.constant 0.000000e+00 : f32
    %6 = vector.broadcast %cst_5 : f32 to vector<16x512xf32>
    %7 = arith.maximumf %5, %6 : vector<16x512xf32>
    %8 = arith.truncf %7 : vector<16x512xf32> to vector<16x512xbf16>
    %c0_6 = arith.constant 0 : index
    %c0_7 = arith.constant 0 : index
    %9 = vector.load %arg4[%c0_6, %c0_7] : memref<512x384xbf16, #tpu.memory_space<vmem>>, vector<512x384xbf16>
    %cst_8 = arith.constant dense<0.000000e+00> : vector<16x384xf32>
    %10 = tpu.matmul %8, %9, %cst_8 {dimension_numbers = #tpu.dot_dimension_numbers<[1], [0], [0], [1], [0, 0, 1, 1], [], []>} : vector<16x512xbf16>, vector<512x384xbf16>, vector<16x384xf32> -> vector<16x384xf32>
    %c0_9 = arith.constant 0 : index
    %c0_10 = arith.constant 0 : index
    %11 = vector.load %arg5[%c0_9, %c0_10] : memref<1x384xf32, #tpu.memory_space<vmem>>, vector<1x384xf32>
    %12 = vector.broadcast %11 : vector<1x384xf32> to vector<16x384xf32>
    %13 = arith.addf %10, %12 : vector<16x384xf32>
    %cst_11 = arith.constant 0.000000e+00 : f32
    %14 = vector.broadcast %cst_11 : f32 to vector<16x384xf32>
    %15 = arith.maximumf %13, %14 : vector<16x384xf32>
    %16 = arith.truncf %15 : vector<16x384xf32> to vector<16x384xbf16>
    %c0_12 = arith.constant 0 : index
    %c0_13 = arith.constant 0 : index
    %17 = vector.load %arg6[%c0_12, %c0_13] : memref<384x128xbf16, #tpu.memory_space<vmem>>, vector<384x128xbf16>
    %cst_14 = arith.constant dense<0.000000e+00> : vector<16x128xf32>
    %18 = tpu.matmul %16, %17, %cst_14 {dimension_numbers = #tpu.dot_dimension_numbers<[1], [0], [0], [1], [0, 0, 1, 1], [], []>} : vector<16x384xbf16>, vector<384x128xbf16>, vector<16x128xf32> -> vector<16x128xf32>
    %c0_15 = arith.constant 0 : index
    %c0_16 = arith.constant 0 : index
    %19 = vector.load %arg7[%c0_15, %c0_16] : memref<1x128xf32, #tpu.memory_space<vmem>>, vector<1x128xf32>
    %20 = vector.broadcast %19 : vector<1x128xf32> to vector<16x128xf32>
    %21 = arith.addf %18, %20 : vector<16x128xf32>
    %22 = math.tanh %21 : vector<16x128xf32>
    %cst_17 = arith.constant 1.000000e+00 : f32
    %23 = vector.broadcast %cst_17 : f32 to vector<16x128xf32>
    %24 = arith.mulf %23, %22 : vector<16x128xf32>
    %c0_18 = arith.constant 0 : index
    %c0_19 = arith.constant 0 : index
    %25 = vector.load %arg8[%c0_18, %c0_19] : memref<16x128xf32, #tpu.memory_space<vmem>>, vector<16x128xf32>
    tpu.vector_store %arg8[%c0_18, %c0_19], %24 {strides = array<i32>} : memref<16x128xf32, #tpu.memory_space<vmem>>, vector<16x128xf32>,
    return
  }
  func.func @transform_0(%arg0: i32) -> (i32, i32) {
    %c0_i32 = arith.constant 0 : i32
    %c0_i32_0 = arith.constant 0 : i32
    return %arg0, %c0_i32 : i32, i32
  }
  func.func @transform_1(%arg0: i32) -> (i32, i32) {
    %c0_i32 = arith.constant 0 : i32
    %c0_i32_0 = arith.constant 0 : i32
    %c0_i32_1 = arith.constant 0 : i32
    return %c0_i32, %c0_i32_0 : i32, i32
  }
  func.func @transform_2(%arg0: i32) -> (i32, i32) {
    %c0_i32 = arith.constant 0 : i32
    %c0_i32_0 = arith.constant 0 : i32
    %c0_i32_1 = arith.constant 0 : i32
    return %c0_i32, %c0_i32_0 : i32, i32
  }
  func.func @transform_3(%arg0: i32) -> (i32, i32) {
    %c0_i32 = arith.constant 0 : i32
    %c0_i32_0 = arith.constant 0 : i32
    %c0_i32_1 = arith.constant 0 : i32
    return %c0_i32, %c0_i32_0 : i32, i32
  }
  func.func @transform_4(%arg0: i32) -> (i32, i32) {
    %c0_i32 = arith.constant 0 : i32
    %c0_i32_0 = arith.constant 0 : i32
    %c0_i32_1 = arith.constant 0 : i32
    return %c0_i32, %c0_i32_0 : i32, i32
  }
  func.func @transform_5(%arg0: i32) -> (i32, i32) {
    %c0_i32 = arith.constant 0 : i32
    %c0_i32_0 = arith.constant 0 : i32
    %c0_i32_1 = arith.constant 0 : i32
    return %c0_i32, %c0_i32_0 : i32, i32
  }
  func.func @transform_6(%arg0: i32) -> (i32, i32) {
    %c0_i32 = arith.constant 0 : i32
    %c0_i32_0 = arith.constant 0 : i32
    %c0_i32_1 = arith.constant 0 : i32
    return %c0_i32, %c0_i32_0 : i32, i32
  }
  func.func @transform_7(%arg0: i32) -> (i32, i32) {
    %c0_i32 = arith.constant 0 : i32
    %c0_i32_0 = arith.constant 0 : i32
    return %arg0, %c0_i32 : i32, i32
  }
}

</mosaic_0001>

<llo_original>
// kernel: actor_dense_forward.1
$region0: #{actor_dense_forward.1}
  #allocation0 [shape = 'u32[]', space=smem, size = 0x4, offset = 0x4, fixed_abs, tag = 'smem constant byte address 0x4 - core index']
  #allocation1 [shape = 'u32[144,128]{1,0:T(1,128)}', space=vmem, size = 0x12000, scoped, tag = 'internal scratch']
  %s0 = inlined_call_operand.vmem [shape: bf16[2,1024], index: 0, kind: input, shape index: {}]
  %s1 = inlined_call_operand.hbm [shape: bf16[1024,512], index: 1, kind: input, shape index: {}]
  %s2 = inlined_call_operand.vmem [shape: f32[1,512], index: 2, kind: input, shape index: {}]
  %s3 = inlined_call_operand.hbm [shape: bf16[512,384], index: 3, kind: input, shape index: {}]
  %s4 = inlined_call_operand.vmem [shape: f32[1,384], index: 4, kind: input, shape index: {}]
  %s5 = inlined_call_operand.vmem [shape: bf16[384,128], index: 5, kind: input, shape index: {}]
  %s6 = inlined_call_operand.vmem [shape: f32[1,128], index: 6, kind: input, shape index: {}]
  %s7 = inlined_call_operand.hbm [shape: f32[2,128], index: 7, kind: output, shape index: {}]
  %s8 = sld [smem:[#allocation0]]
  $region46: #{actor_dense_forward.1} parent=0
    _
  %s10 = ssub.s32 1, %s8
  %s11 = scalar_select 0, %s10, %s8
  $region1: #{actor_dense_forward.1} parent=0
    #allocation2 [shape = 'u8[1048576]{0}', space=vmem, size = 0x100000, scoped, tag = 'input window, operand 1, single buffered']
    #allocation3 [shape = 's32[1]{0}', space=sflag, size = 0x4, scoped, tag = 'scoped memory for actor_dense_forward.1']
    #allocation4 [shape = 's32[1]{0}', space=sflag, size = 0x4, scoped, tag = 'scoped memory for actor_dense_forward.1']
    #allocation5 [shape = 'u8[393216]{0}', space=vmem, size = 0x60000, scoped, tag = 'input window, operand 3, single buffered']
    #allocation6 [shape = 's32[1]{0}', space=sflag, size = 0x4, scoped, tag = 'scoped memory for actor_dense_forward.1']
    #allocation7 [shape = 'u8[8192]{0}', space=vmem, size = 0x2000, scoped, tag = 'output window, operand 0, single buffered']
    %12 = vsyncpa [#allocation3], 0
    %13 = vsyncpa [#allocation6], 0
    %14 = vsyncpa [#allocation4], 0
    // Predicated region
    $region2: #{actor_dense_forward.1} parent=1 // pred_check
      _
    $region3: #{actor_dense_forward.1} parent=1 // pred_check_branch
      %16 = sbr.rel (0) target = $region5
    $region4: #{actor_dense_forward.1} parent=1 // pred_region
      _
    $region5: #{actor_dense_forward.1} parent=1 // pred_fallthru
      _
    // Predicated region
    $region6: #{actor_dense_forward.1} parent=1 // pred_check
      _
    $region7: #{actor_dense_forward.1} parent=1 // pred_check_branch
      %18 = sbr.rel (0) target = $region9
    $region8: #{actor_dense_forward.1} parent=1 // pred_region
      %s20 = ssub.s32 32768, 32768
      %21 = vsyncadd [#allocation3], %s20
      %s22 = sshll.u32 [#allocation2], 4
      %s23 = int_to_ptr.vmem [resolvable:$true] %s22
      %28 = dma.hbm_to_vmem [thread:$0]  %s1, 32768, %s23, [#allocation3], 256, 256, 16
    $region9: #{actor_dense_forward.1} parent=1 // pred_fallthru
      _
    // Predicated region
    $region10: #{actor_dense_forward.1} parent=1 // pred_check
      _
    $region11: #{actor_dense_forward.1} parent=1 // pred_check_branch
      %30 = sbr.rel (0) target = $region13
    $region12: #{actor_dense_forward.1} parent=1 // pred_region
      _
    $region13: #{actor_dense_forward.1} parent=1 // pred_fallthru
      _
    // Predicated region
    $region14: #{actor_dense_forward.1} parent=1 // pred_check
      _
    $region15: #{actor_dense_forward.1} parent=1 // pred_check_branch
      %32 = sbr.rel (0) target = $region17
    $region16: #{actor_dense_forward.1} parent=1 // pred_region
      %s34 = ssub.s32 12288, 12288
      %35 = vsyncadd [#allocation6], %s34
      %s36 = sshll.u32 [#allocation5], 4
      %s37 = int_to_ptr.vmem [resolvable:$true] %s36
      %42 = dma.hbm_to_vmem [thread:$0]  %s3, 12288, %s37, [#allocation6], 192, 192, 12
    $region17: #{actor_dense_forward.1} parent=1 // pred_fallthru
      _
    // Predicated region
    $region18: #{actor_dense_forward.1} parent=1 // pred_check
      _
    $region19: #{actor_dense_forward.1} parent=1 // pred_check_branch
      %44 = sbr.rel (0) target = $region21
    $region20: #{actor_dense_forward.1} parent=1 // pred_region
      _
    $region21: #{actor_dense_forward.1} parent=1 // pred_fallthru
      _
    // Predicated region
    $region22: #{actor_dense_forward.1} parent=1 // pred_check
      _
    $region23: #{actor_dense_forward.1} parent=1 // pred_check_branch
      %46 = sbr.rel (0) target = $region25
    $region24: #{actor_dense_forward.1} parent=1 // pred_region
      _
    $region25: #{actor_dense_forward.1} parent=1 // pred_fallthru
      _
    // Predicated region
    $region26: #{actor_dense_forward.1} parent=1 // pred_check
      _
    $region27: #{actor_dense_forward.1} parent=1 // pred_check_branch
      %48 = sbr.rel (0) target = $region29
    $region28: #{actor_dense_forward.1} parent=1 // pred_region
      _
    $region29: #{actor_dense_forward.1} parent=1 // pred_fallthru
      _
    // Predicated region
    $region30: #{actor_dense_forward.1} parent=1 // pred_check
      _
    $region31: #{actor_dense_forward.1} parent=1 // pred_check_branch
      %50 = sbr.rel (0) target = $region33
    $region32: #{actor_dense_forward.1} parent=1 // pred_region
      %51 = dma.done [#allocation3], 32768
    $region33: #{actor_dense_forward.1} parent=1 // pred_fallthru
      _
    // Predicated region
    $region34: #{actor_dense_forward.1} parent=1 // pred_check
      _
    $region35: #{actor_dense_forward.1} parent=1 // pred_check_branch
      %53 = sbr.rel (0) target = $region37
    $region36: #{actor_dense_forward.1} parent=1 // pred_region
      %54 = dma.done [#allocation6], 12288
    $region37: #{actor_dense_forward.1} parent=1 // pred_fallthru
      _
    %v56 = vld [vmem:[%s0] sm:$0xff]
    %v57 = vld [vmem:[%s0 + $0x8] sm:$0xff]
    %v58 = vld [vmem:[%s0 + $0x10] sm:$0xff]
    %v59 = vld [vmem:[%s0 + $0x18] sm:$0xff]
    %v60 = vld [vmem:[%s0 + $0x20] sm:$0xff]
    %v61 = vld [vmem:[%s0 + $0x28] sm:$0xff]
    %v62 = vld [vmem:[%s0 + $0x30] sm:$0xff]
    %v63 = vld [vmem:[%s0 + $0x38] sm:$0xff]
    %v64 = vld [vmem:[#allocation2] sm:$0xff]
    %v65 = vld [vmem:[#allocation2 + $0x8] sm:$0xff]
    %v66 = vld [vmem:[#allocation2 + $0x10] sm:$0xff]
    %v67 = vld [vmem:[#allocation2 + $0x18] sm:$0xff]
    %v68 = vld [vmem:[#allocation2 + $0x20] sm:$0xff]
    %v69 = vld [vmem:[#allocation2 + $0x28] sm:$0xff]
    %v70 = vld [vmem:[#allocation2 + $0x30] sm:$0xff]
    %v71 = vld [vmem:[#allocation2 + $0x38] sm:$0xff]
    %v72 = vld [vmem:[#allocation2 + $0x40] sm:$0xff]
    %v73 = vld [vmem:[#allocation2 + $0x48] sm:$0xff]
    %v74 = vld [vmem:[#allocation2 + $0x50] sm:$0xff]
    %v75 = vld [vmem:[#allocation2 + $0x58] sm:$0xff]
    %v76 = vld [vmem:[#allocation2 + $0x60] sm:$0xff]
    %v77 = vld [vmem:[#allocation2 + $0x68] sm:$0xff]
    %v78 = vld [vmem:[#allocation2 + $0x70] sm:$0xff]
    %v79 = vld [vmem:[#allocation2 + $0x78] sm:$0xff]
    %v80 = vld [vmem:[#allocation2 + $0x80] sm:$0xff]
    %v81 = vld [vmem:[#allocation2 + $0x88] sm:$0xff]
    %v82 = vld [vmem:[#allocation2 + $0x90] sm:$0xff]
    %v83 = vld [vmem:[#allocation2 + $0x98] sm:$0xff]
    %v84 = vld [vmem:[#allocation2 + $0xa0] sm:$0xff]
    %v85 = vld [vmem:[#allocation2 + $0xa8] sm:$0xff]
    %v86 = vld [vmem:[#allocation2 + $0xb0] sm:$0xff]
    %v87 = vld [vmem:[#allocation2 + $0xb8] sm:$0xff]
    %v88 = vld [vmem:[#allocation2 + $0xc0] sm:$0xff]
    %v89 = vld [vmem:[#allocation2 + $0xc8] sm:$0xff]
    %v90 = vld [vmem:[#allocation2 + $0xd0] sm:$0xff]
    %v91 = vld [vmem:[#allocation2 + $0xd8] sm:$0xff]
    %v92 = vld [vmem:[#allocation2 + $0xe0] sm:$0xff]
    %v93 = vld [vmem:[#allocation2 + $0xe8] sm:$0xff]
    %v94 = vld [vmem:[#allocation2 + $0xf0] sm:$0xff]
    %v95 = vld [vmem:[#allocation2 + $0xf8] sm:$0xff]
    %v96 = vld [vmem:[#allocation2 + $0x100] sm:$0xff]
    %v97 = vld [vmem:[#allocation2 + $0x108] sm:$0xff]
    %v98 = vld [vmem:[#allocation2 + $0x110] sm:$0xff]
    %v99 = vld [vmem:[#allocation2 + $0x118] sm:$0xff]
    %v100 = vld [vmem:[#allocation2 + $0x120] sm:$0xff]
    %v101 = vld [vmem:[#allocation2 + $0x128] sm:$0xff]
    %v102 = vld [vmem:[#allocation2 + $0x130] sm:$0xff]
    %v103 = vld [vmem:[#allocation2 + $0x138] sm:$0xff]
    %v104 = vld [vmem:[#allocation2 + $0x140] sm:$0xff]
    %v105 = vld [vmem:[#allocation2 + $0x148] sm:$0xff]
    %v106 = vld [vmem:[#allocation2 + $0x150] sm:$0xff]
    %v107 = vld [vmem:[#allocation2 + $0x158] sm:$0xff]
    %v108 = vld [vmem:[#allocation2 + $0x160] sm:$0xff]
    %v109 = vld [vmem:[#allocation2 + $0x168] sm:$0xff]
    %v110 = vld [vmem:[#allocation2 + $0x170] sm:$0xff]
    %v111 = vld [vmem:[#allocation2 + $0x178] sm:$0xff]
    %v112 = vld [vmem:[#allocation2 + $0x180] sm:$0xff]
    %v113 = vld [vmem:[#allocation2 + $0x188] sm:$0xff]
    %v114 = vld [vmem:[#allocation2 + $0x190] sm:$0xff]
    %v115 = vld [vmem:[#allocation2 + $0x198] sm:$0xff]
    %v116 = vld [vmem:[#allocation2 + $0x1a0] sm:$0xff]
    %v117 = vld [vmem:[#allocation2 + $0x1a8] sm:$0xff]
    %v118 = vld [vmem:[#allocation2 + $0x1b0] sm:$0xff]
    %v119 = vld [vmem:[#allocation2 + $0x1b8] sm:$0xff]
    %v120 = vld [vmem:[#allocation2 + $0x1c0] sm:$0xff]
    %v121 = vld [vmem:[#allocation2 + $0x1c8] sm:$0xff]
    %v122 = vld [vmem:[#allocation2 + $0x1d0] sm:$0xff]
    %v123 = vld [vmem:[#allocation2 + $0x1d8] sm:$0xff]
    %v124 = vld [vmem:[#allocation2 + $0x1e0] sm:$0xff]
    %v125 = vld [vmem:[#allocation2 + $0x1e8] sm:$0xff]
    %v126 = vld [vmem:[#allocation2 + $0x1f0] sm:$0xff]
    %v127 = vld [vmem:[#allocation2 + $0x1f8] sm:$0xff]
    %v128 = vld [vmem:[#allocation2 + $0x200] sm:$0xff]
    %v129 = vld [vmem:[#allocation2 + $0x208] sm:$0xff]
    %v130 = vld [vmem:[#allocation2 + $0x210] sm:$0xff]
    %v131 = vld [vmem:[#allocation2 + $0x218] sm:$0xff]
    %v132 = vld [vmem:[#allocation2 + $0x220] sm:$0xff]
    %v133 = vld [vmem:[#allocation2 + $0x228] sm:$0xff]
    %v134 = vld [vmem:[#allocation2 + $0x230] sm:$0xff]
    %v135 = vld [vmem:[#allocation2 + $0x238] sm:$0xff]
    %v136 = vld [vmem:[#allocation2 + $0x240] sm:$0xff]
    %v137 = vld [vmem:[#allocation2 + $0x248] sm:$0xff]
    %v138 = vld [vmem:[#allocation2 + $0x250] sm:$0xff]
    %v139 = vld [vmem:[#allocation2 + $0x258] sm:$0xff]
    %v140 = vld [vmem:[#allocation2 + $0x260] sm:$0xff]
    %v141 = vld [vmem:[#allocation2 + $0x268] sm:$0xff]
    %v142 = vld [vmem:[#allocation2 + $0x270] sm:$0xff]
    %v143 = vld [vmem:[#allocation2 + $0x278] sm:$0xff]
    %v144 = vld [vmem:[#allocation2 + $0x280] sm:$0xff]
    %v145 = vld [vmem:[#allocation2 + $0x288] sm:$0xff]
    %v146 = vld [vmem:[#allocation2 + $0x290] sm:$0xff]
    %v147 = vld [vmem:[#allocation2 + $0x298] sm:$0xff]
    %v148 = vld [vmem:[#allocation2 + $0x2a0] sm:$0xff]
    %v149 = vld [vmem:[#allocation2 + $0x2a8] sm:$0xff]
    %v150 = vld [vmem:[#allocation2 + $0x2b0] sm:$0xff]
    %v151 = vld [vmem:[#allocation2 + $0x2b8] sm:$0xff]
    %v152 = vld [vmem:[#allocation2 + $0x2c0] sm:$0xff]
    %v153 = vld [vmem:[#allocation2 + $0x2c8] sm:$0xff]
    %v154 = vld [vmem:[#allocation2 + $0x2d0] sm:$0xff]
    %v155 = vld [vmem:[#allocation2 + $0x2d8] sm:$0xff]
    %v156 = vld [vmem:[#allocation2 + $0x2e0] sm:$0xff]
    %v157 = vld [vmem:[#allocation2 + $0x2e8] sm:$0xff]
    %v158 = vld [vmem:[#allocation2 + $0x2f0] sm:$0xff]
    %v159 = vld [vmem:[#allocation2 + $0x2f8] sm:$0xff]
    %v160 = vld [vmem:[#allocation2 + $0x300] sm:$0xff]
    %v161 = vld [vmem:[#allocation2 + $0x308] sm:$0xff]
    %v162 = vld [vmem:[#allocation2 + $0x310] sm:$0xff]
    %v163 = vld [vmem:[#allocation2 + $0x318] sm:$0xff]
    %v164 = vld [vmem:[#allocation2 + $0x320] sm:$0xff]
    %v165 = vld [vmem:[#allocation2 + $0x328] sm:$0xff]
    %v166 = vld [vmem:[#allocation2 + $0x330] sm:$0xff]
    %v167 = vld [vmem:[#allocation2 + $0x338] sm:$0xff]
    %v168 = vld [vmem:[#allocation2 + $0x340] sm:$0xff]
    %v169 = vld [vmem:[#allocation2 + $0x348] sm:$0xff]
    %v170 = vld [vmem:[#allocation2 + $0x350] sm:$0xff]
    %v171 = vld [vmem:[#allocation2 + $0x358] sm:$0xff]
    %v172 = vld [vmem:[#allocation2 + $0x360] sm:$0xff]
    %v173 = vld [vmem:[#allocation2 + $0x368] sm:$0xff]
    %v174 = vld [vmem:[#allocation2 + $0x370] sm:$0xff]
    %v175 = vld [vmem:[#allocation2 + $0x378] sm:$0xff]
    %v176 = vld [vmem:[#allocation2 + $0x380] sm:$0xff]
    %v177 = vld [vmem:[#allocation2 + $0x388] sm:$0xff]
    %v178 = vld [vmem:[#allocation2 + $0x390] sm:$0xff]
    %v179 = vld [vmem:[#allocation2 + $0x398] sm:$0xff]
    %v180 = vld [vmem:[#allocation2 + $0x3a0] sm:$0xff]
    %v181 = vld [vmem:[#allocation2 + $0x3a8] sm:$0xff]
    %v182 = vld [vmem:[#allocation2 + $0x3b0] sm:$0xff]
    %v183 = vld [vmem:[#allocation2 + $0x3b8] sm:$0xff]
    %v184 = vld [vmem:[#allocation2 + $0x3c0] sm:$0xff]
    %v185 = vld [vmem:[#allocation2 + $0x3c8] sm:$0xff]
    %v186 = vld [vmem:[#allocation2 + $0x3d0] sm:$0xff]
    %v187 = vld [vmem:[#allocation2 + $0x3d8] sm:$0xff]
    %v188 = vld [vmem:[#allocation2 + $0x3e0] sm:$0xff]
    %v189 = vld [vmem:[#allocation2 + $0x3e8] sm:$0xff]
    %v190 = vld [vmem:[#allocation2 + $0x3f0] sm:$0xff]
    %v191 = vld [vmem:[#allocation2 + $0x3f8] sm:$0xff]
    %v192 = vld [vmem:[#allocation2 + $0x400] sm:$0xff]
    %v193 = vld [vmem:[#allocation2 + $0x408] sm:$0xff]
    %v194 = vld [vmem:[#allocation2 + $0x410] sm:$0xff]
    %v195 = vld [vmem:[#allocation2 + $0x418] sm:$0xff]
    %v196 = vld [vmem:[#allocation2 + $0x420] sm:$0xff]
    %v197 = vld [vmem:[#allocation2 + $0x428] sm:$0xff]
    %v198 = vld [vmem:[#allocation2 + $0x430] sm:$0xff]
    %v199 = vld [vmem:[#allocation2 + $0x438] sm:$0xff]
    %v200 = vld [vmem:[#allocation2 + $0x440] sm:$0xff]
    %v201 = vld [vmem:[#allocation2 + $0x448] sm:$0xff]
    %v202 = vld [vmem:[#allocation2 + $0x450] sm:$0xff]
    %v203 = vld [vmem:[#allocation2 + $0x458] sm:$0xff]
    %v204 = vld [vmem:[#allocation2 + $0x460] sm:$0xff]
    %v205 = vld [vmem:[#allocation2 + $0x468] sm:$0xff]
    %v206 = vld [vmem:[#allocation2 + $0x470] sm:$0xff]
    %v207 = vld [vmem:[#allocation2 + $0x478] sm:$0xff]
    %v208 = vld [vmem:[#allocation2 + $0x480] sm:$0xff]
    %v209 = vld [vmem:[#allocation2 + $0x488] sm:$0xff]
    %v210 = vld [vmem:[#allocation2 + $0x490] sm:$0xff]
    %v211 = vld [vmem:[#allocation2 + $0x498] sm:$0xff]
    %v212 = vld [vmem:[#allocation2 + $0x4a0] sm:$0xff]
    %v213 = vld [vmem:[#allocation2 + $0x4a8] sm:$0xff]
    %v214 = vld [vmem:[#allocation2 + $0x4b0] sm:$0xff]
    %v215 = vld [vmem:[#allocation2 + $0x4b8] sm:$0xff]
    %v216 = vld [vmem:[#allocation2 + $0x4c0] sm:$0xff]
    %v217 = vld [vmem:[#allocation2 + $0x4c8] sm:$0xff]
    %v218 = vld [vmem:[#allocation2 + $0x4d0] sm:$0xff]
    %v219 = vld [vmem:[#allocation2 + $0x4d8] sm:$0xff]
    %v220 = vld [vmem:[#allocation2 + $0x4e0] sm:$0xff]
    %v221 = vld [vmem:[#allocation2 + $0x4e8] sm:$0xff]
    %v222 = vld [vmem:[#allocation2 + $0x4f0] sm:$0xff]
    %v223 = vld [vmem:[#allocation2 + $0x4f8] sm:$0xff]
    %v224 = vld [vmem:[#allocation2 + $0x500] sm:$0xff]
    %v225 = vld [vmem:[#allocation2 + $0x508] sm:$0xff]
    %v226 = vld [vmem:[#allocation2 + $0x510] sm:$0xff]
    %v227 = vld [vmem:[#allocation2 + $0x518] sm:$0xff]
    %v228 = vld [vmem:[#allocation2 + $0x520] sm:$0xff]
    %v229 = vld [vmem:[#allocation2 + $0x528] sm:$0xff]
    %v230 = vld [vmem:[#allocation2 + $0x530] sm:$0xff]
    %v231 = vld [vmem:[#allocation2 + $0x538] sm:$0xff]
    %v232 = vld [vmem:[#allocation2 + $0x540] sm:$0xff]
    %v233 = vld [vmem:[#allocation2 + $0x548] sm:$0xff]
    %v234 = vld [vmem:[#allocation2 + $0x550] sm:$0xff]
    %v235 = vld [vmem:[#allocation2 + $0x558] sm:$0xff]
    %v236 = vld [vmem:[#allocation2 + $0x560] sm:$0xff]
    %v237 = vld [vmem:[#allocation2 + $0x568] sm:$0xff]
    %v238 = vld [vmem:[#allocation2 + $0x570] sm:$0xff]
    %v239 = vld [vmem:[#allocation2 + $0x578] sm:$0xff]
    %v240 = vld [vmem:[#allocation2 + $0x580] sm:$0xff]
    %v241 = vld [vmem:[#allocation2 + $0x588] sm:$0xff]
    %v242 = vld [vmem:[#allocation2 + $0x590] sm:$0xff]
    %v243 = vld [vmem:[#allocation2 + $0x598] sm:$0xff]
    %v244 = vld [vmem:[#allocation2 + $0x5a0] sm:$0xff]
    %v245 = vld [vmem:[#allocation2 + $0x5a8] sm:$0xff]
    %v246 = vld [vmem:[#allocation2 + $0x5b0] sm:$0xff]
    %v247 = vld [vmem:[#allocation2 + $0x5b8] sm:$0xff]
    %v248 = vld [vmem:[#allocation2 + $0x5c0] sm:$0xff]
    %v249 = vld [vmem:[#allocation2 + $0x5c8] sm:$0xff]
    %v250 = vld [vmem:[#allocation2 + $0x5d0] sm:$0xff]
    %v251 = vld [vmem:[#allocation2 + $0x5d8] sm:$0xff]
    %v252 = vld [vmem:[#allocation2 + $0x5e0] sm:$0xff]
    %v253 = vld [vmem:[#allocation2 + $0x5e8] sm:$0xff]
    %v254 = vld [vmem:[#allocation2 + $0x5f0] sm:$0xff]
    %v255 = vld [vmem:[#allocation2 + $0x5f8] sm:$0xff]
    %v256 = vld [vmem:[#allocation2 + $0x600] sm:$0xff]
    %v257 = vld [vmem:[#allocation2 + $0x608] sm:$0xff]
    %v258 = vld [vmem:[#allocation2 + $0x610] sm:$0xff]
    %v259 = vld [vmem:[#allocation2 + $0x618] sm:$0xff]
    %v260 = vld [vmem:[#allocation2 + $0x620] sm:$0xff]
    %v261 = vld [vmem:[#allocation2 + $0x628] sm:$0xff]
    %v262 = vld [vmem:[#allocation2 + $0x630] sm:$0xff]
    %v263 = vld [vmem:[#allocation2 + $0x638] sm:$0xff]
    %v264 = vld [vmem:[#allocation2 + $0x640] sm:$0xff]
    %v265 = vld [vmem:[#allocation2 + $0x648] sm:$0xff]
    %v266 = vld [vmem:[#allocation2 + $0x650] sm:$0xff]
    %v267 = vld [vmem:[#allocation2 + $0x658] sm:$0xff]
    %v268 = vld [vmem:[#allocation2 + $0x660] sm:$0xff]
    %v269 = vld [vmem:[#allocation2 + $0x668] sm:$0xff]
    %v270 = vld [vmem:[#allocation2 + $0x670] sm:$0xff]
    %v271 = vld [vmem:[#allocation2 + $0x678] sm:$0xff]
    %v272 = vld [vmem:[#allocation2 + $0x680] sm:$0xff]
    %v273 = vld [vmem:[#allocation2 + $0x688] sm:$0xff]
    %v274 = vld [vmem:[#allocation2 + $0x690] sm:$0xff]
    %v275 = vld [vmem:[#allocation2 + $0x698] sm:$0xff]
    %v276 = vld [vmem:[#allocation2 + $0x6a0] sm:$0xff]
    %v277 = vld [vmem:[#allocation2 + $0x6a8] sm:$0xff]
    %v278 = vld [vmem:[#allocation2 + $0x6b0] sm:$0xff]
    %v279 = vld [vmem:[#allocation2 + $0x6b8] sm:$0xff]
    %v280 = vld [vmem:[#allocation2 + $0x6c0] sm:$0xff]
    %v281 = vld [vmem:[#allocation2 + $0x6c8] sm:$0xff]
    %v282 = vld [vmem:[#allocation2 + $0x6d0] sm:$0xff]
    %v283 = vld [vmem:[#allocation2 + $0x6d8] sm:$0xff]
    %v284 = vld [vmem:[#allocation2 + $0x6e0] sm:$0xff]
    %v285 = vld [vmem:[#allocation2 + $0x6e8] sm:$0xff]
    %v286 = vld [vmem:[#allocation2 + $0x6f0] sm:$0xff]
    %v287 = vld [vmem:[#allocation2 + $0x6f8] sm:$0xff]
    %v288 = vld [vmem:[#allocation2 + $0x700] sm:$0xff]
    %v289 = vld [vmem:[#allocation2 + $0x708] sm:$0xff]
    %v290 = vld [vmem:[#allocation2 + $0x710] sm:$0xff]
    %v291 = vld [vmem:[#allocation2 + $0x718] sm:$0xff]
    %v292 = vld [vmem:[#allocation2 + $0x720] sm:$0xff]
    %v293 = vld [vmem:[#allocation2 + $0x728] sm:$0xff]
    %v294 = vld [vmem:[#allocation2 + $0x730] sm:$0xff]
    %v295 = vld [vmem:[#allocation2 + $0x738] sm:$0xff]
    %v296 = vld [vmem:[#allocation2 + $0x740] sm:$0xff]
    %v297 = vld [vmem:[#allocation2 + $0x748] sm:$0xff]
    %v298 = vld [vmem:[#allocation2 + $0x750] sm:$0xff]
    %v299 = vld [vmem:[#allocation2 + $0x758] sm:$0xff]
    %v300 = vld [vmem:[#allocation2 + $0x760] sm:$0xff]
    %v301 = vld [vmem:[#allocation2 + $0x768] sm:$0xff]
    %v302 = vld [vmem:[#allocation2 + $0x770] sm:$0xff]
    %v303 = vld [vmem:[#allocation2 + $0x778] sm:$0xff]
    %v304 = vld [vmem:[#allocation2 + $0x780] sm:$0xff]
    %v305 = vld [vmem:[#allocation2 + $0x788] sm:$0xff]
    %v306 = vld [vmem:[#allocation2 + $0x790] sm:$0xff]
    %v307 = vld [vmem:[#allocation2 + $0x798] sm:$0xff]
    %v308 = vld [vmem:[#allocation2 + $0x7a0] sm:$0xff]
    %v309 = vld [vmem:[#allocation2 + $0x7a8] sm:$0xff]
    %v310 = vld [vmem:[#allocation2 + $0x7b0] sm:$0xff]
    %v311 = vld [vmem:[#allocation2 + $0x7b8] sm:$0xff]
    %v312 = vld [vmem:[#allocation2 + $0x7c0] sm:$0xff]
    %v313 = vld [vmem:[#allocation2 + $0x7c8] sm:$0xff]
    %v314 = vld [vmem:[#allocation2 + $0x7d0] sm:$0xff]
    %v315 = vld [vmem:[#allocation2 + $0x7d8] sm:$0xff]
    %v316 = vld [vmem:[#allocation2 + $0x7e0] sm:$0xff]
    %v317 = vld [vmem:[#allocation2 + $0x7e8] sm:$0xff]
    %v318 = vld [vmem:[#allocation2 + $0x7f0] sm:$0xff]
    %v319 = vld [vmem:[#allocation2 + $0x7f8] sm:$0xff]
    %v320 = vld [vmem:[%s2] sm:$0xf]
    %v322 = vlaneseq
    %v323 = vshrl.u32 %v322, 7
    %v324 = vsub.s32 0, %v323
    %v325 = vrot.slane %v320, %v324
    %v326 = vlaneseq
    %v327 = vshrl.u32 %v326, 7
    %v328 = vsub.s32 1, %v327
    %v329 = vrot.slane %v320, %v328
    %v330 = vlaneseq
    %v331 = vshrl.u32 %v330, 7
    %v332 = vsub.s32 2, %v331
    %v333 = vrot.slane %v320, %v332
    %v334 = vlaneseq
    %v335 = vshrl.u32 %v334, 7
    %v336 = vsub.s32 3, %v335
    %v337 = vrot.slane %v320, %v336
    %v350 = vcombine.low %v56, %v57
    %v351 = vcombine.high %v56, %v57
    %v352 = vcombine.low %v58, %v59
    %v353 = vcombine.high %v58, %v59
    %v354 = vcombine.low %v60, %v61
    %v355 = vcombine.high %v60, %v61
    %v356 = vcombine.low %v62, %v63
    %v357 = vcombine.high %v62, %v63
    %v359 = vunpack.c.l.s4 1966171168
    %v360 = vunpack.c.0.s8 %v359
    %v361 = vlaneseq
    %v362 = vshrl.u32 %v361, 7
    %v363 = vsub.s32 %v360, %v362
    %v364 = vrot.slane %v350, %v363
    %v366 = vunpack.c.l.s4 1966171168
    %v367 = vunpack.c.0.s8 %v366
    %v368 = vlaneseq
    %v369 = vshrl.u32 %v368, 7
    %v370 = vsub.s32 %v367, %v369
    %v371 = vrot.slane %v351, %v370
    %v373 = vunpack.c.l.s4 1966171168
    %v374 = vunpack.c.0.s8 %v373
    %v375 = vlaneseq
    %v376 = vshrl.u32 %v375, 7
    %v377 = vsub.s32 %v374, %v376
    %v378 = vrot.slane %v352, %v377
    %v380 = vunpack.c.l.s4 1966171168
    %v381 = vunpack.c.0.s8 %v380
    %v382 = vlaneseq
    %v383 = vshrl.u32 %v382, 7
    %v384 = vsub.s32 %v381, %v383
    %v385 = vrot.slane %v353, %v384
    %v387 = vunpack.c.l.s4 1966171168
    %v388 = vunpack.c.0.s8 %v387
    %v389 = vlaneseq
    %v390 = vshrl.u32 %v389, 7
    %v391 = vsub.s32 %v388, %v390
    %v392 = vrot.slane %v354, %v391
    %v394 = vunpack.c.l.s4 1966171168
    %v395 = vunpack.c.0.s8 %v394
    %v396 = vlaneseq
    %v397 = vshrl.u32 %v396, 7
    %v398 = vsub.s32 %v395, %v397
    %v399 = vrot.slane %v355, %v398
    %v401 = vunpack.c.l.s4 1966171168
    %v402 = vunpack.c.0.s8 %v401
    %v403 = vlaneseq
    %v404 = vshrl.u32 %v403, 7
    %v405 = vsub.s32 %v402, %v404
    %v406 = vrot.slane %v356, %v405
    %v408 = vunpack.c.l.s4 1966171168
    %v409 = vunpack.c.0.s8 %v408
    %v410 = vlaneseq
    %v411 = vshrl.u32 %v410, 7
    %v412 = vsub.s32 %v409, %v411
    %v413 = vrot.slane %v357, %v412
    %v414 = vcombine.low %v364, %v378
    %v415 = vcombine.high %v364, %v378
    %v416 = vcombine.low %v371, %v385
    %v417 = vcombine.high %v371, %v385
    %v418 = vcombine.low %v392, %v406
    %v419 = vcombine.high %v392, %v406
    %v420 = vcombine.low %v399, %v413
    %v421 = vcombine.high %v399, %v413
    %v423 = vunpack.c.l.s4 1966171168
    %v424 = vunpack.c.0.s8 %v423
    %v425 = vlaneseq
    %v426 = vshrl.u32 %v425, 7
    %v427 = vsub.s32 %v424, %v426
    %v428 = vrot.slane %v414, %v427
    %v430 = vunpack.c.l.s4 1966171168
    %v431 = vunpack.c.0.s8 %v430
    %v432 = vlaneseq
    %v433 = vshrl.u32 %v432, 7
    %v434 = vsub.s32 %v431, %v433
    %v435 = vrot.slane %v416, %v434
    %v437 = vunpack.c.l.s4 1966171168
    %v438 = vunpack.c.0.s8 %v437
    %v439 = vlaneseq
    %v440 = vshrl.u32 %v439, 7
    %v441 = vsub.s32 %v438, %v440
    %v442 = vrot.slane %v415, %v441
    %v444 = vunpack.c.l.s4 1966171168
    %v445 = vunpack.c.0.s8 %v444
    %v446 = vlaneseq
    %v447 = vshrl.u32 %v446, 7
    %v448 = vsub.s32 %v445, %v447
    %v449 = vrot.slane %v417, %v448
    %v451 = vunpack.c.l.s4 1966171168
    %v452 = vunpack.c.0.s8 %v451
    %v453 = vlaneseq
    %v454 = vshrl.u32 %v453, 7
    %v455 = vsub.s32 %v452, %v454
    %v456 = vrot.slane %v418, %v455
    %v458 = vunpack.c.l.s4 1966171168
    %v459 = vunpack.c.0.s8 %v458
    %v460 = vlaneseq
    %v461 = vshrl.u32 %v460, 7
    %v462 = vsub.s32 %v459, %v461
    %v463 = vrot.slane %v420, %v462
    %v465 = vunpack.c.l.s4 1966171168
    %v466 = vunpack.c.0.s8 %v465
    %v467 = vlaneseq
    %v468 = vshrl.u32 %v467, 7
    %v469 = vsub.s32 %v466, %v468
    %v470 = vrot.slane %v419, %v469
    %v472 = vunpack.c.l.s4 1966171168
    %v473 = vunpack.c.0.s8 %v472
    %v474 = vlaneseq
    %v475 = vshrl.u32 %v474, 7
    %v476 = vsub.s32 %v473, %v475
    %v477 = vrot.slane %v421, %v476
    %v478 = vcombine.low %v428, %v456
    %v479 = vcombine.high %v428, %v456
    %v480 = vcombine.low %v435, %v463
    %v481 = vcombine.high %v435, %v463
    %v482 = vcombine.low %v442, %v470
    %v483 = vcombine.high %v442, %v470
    %v484 = vcombine.low %v449, %v477
    %v485 = vcombine.high %v449, %v477
    %v750 = vunpack.c.l.b16 %v64
    %v751 = vunpack.c.h.b16 %v64
    %v752 = vunpack.c.l.b16 %v65
    %v753 = vunpack.c.h.b16 %v65
    %v754 = vunpack.c.l.b16 %v66
    %v755 = vunpack.c.h.b16 %v66
    %v756 = vunpack.c.l.b16 %v67
    %v757 = vunpack.c.h.b16 %v67
    %v758 = vunpack.c.l.b16 %v68
    %v759 = vunpack.c.h.b16 %v68
    %v760 = vunpack.c.l.b16 %v69
    %v761 = vunpack.c.h.b16 %v69
    %v762 = vunpack.c.l.b16 %v70
    %v763 = vunpack.c.h.b16 %v70
    %v764 = vunpack.c.l.b16 %v71
    %v765 = vunpack.c.h.b16 %v71
    %v766 = vunpack.c.l.b16 %v72
    %v767 = vunpack.c.h.b16 %v72
    %v768 = vunpack.c.l.b16 %v73
    %v769 = vunpack.c.h.b16 %v73
    %v770 = vunpack.c.l.b16 %v74
    %v771 = vunpack.c.h.b16 %v74
    %v772 = vunpack.c.l.b16 %v75
    %v773 = vunpack.c.h.b16 %v75
    %v774 = vunpack.c.l.b16 %v76
    %v775 = vunpack.c.h.b16 %v76
    %v776 = vunpack.c.l.b16 %v77
    %v777 = vunpack.c.h.b16 %v77
    %v778 = vunpack.c.l.b16 %v78
    %v779 = vunpack.c.h.b16 %v78
    %v780 = vunpack.c.l.b16 %v79
    %v781 = vunpack.c.h.b16 %v79
    %v782 = vunpack.c.l.b16 %v80
    %v783 = vunpack.c.h.b16 %v80
    %v784 = vunpack.c.l.b16 %v81
    %v785 = vunpack.c.h.b16 %v81
    %v786 = vunpack.c.l.b16 %v82
    %v787 = vunpack.c.h.b16 %v82
    %v788 = vunpack.c.l.b16 %v83
    %v789 = vunpack.c.h.b16 %v83
    %v790 = vunpack.c.l.b16 %v84
    %v791 = vunpack.c.h.b16 %v84
    %v792 = vunpack.c.l.b16 %v85
    %v793 = vunpack.c.h.b16 %v85
    %v794 = vunpack.c.l.b16 %v86
    %v795 = vunpack.c.h.b16 %v86
    %v796 = vunpack.c.l.b16 %v87
    %v797 = vunpack.c.h.b16 %v87
    %v798 = vunpack.c.l.b16 %v88
    %v799 = vunpack.c.h.b16 %v88
    %v800 = vunpack.c.l.b16 %v89
    %v801 = vunpack.c.h.b16 %v89
    %v802 = vunpack.c.l.b16 %v90
    %v803 = vunpack.c.h.b16 %v90
    %v804 = vunpack.c.l.b16 %v91
    %v805 = vunpack.c.h.b16 %v91
    %v806 = vunpack.c.l.b16 %v92
    %v807 = vunpack.c.h.b16 %v92
    %v808 = vunpack.c.l.b16 %v93
    %v809 = vunpack.c.h.b16 %v93
    %v810 = vunpack.c.l.b16 %v94
    %v811 = vunpack.c.h.b16 %v94
    %v812 = vunpack.c.l.b16 %v95
    %v813 = vunpack.c.h.b16 %v95
    %v814 = vunpack.c.l.b16 %v96
    %v815 = vunpack.c.h.b16 %v96
    %v816 = vunpack.c.l.b16 %v97
    %v817 = vunpack.c.h.b16 %v97
    %v818 = vunpack.c.l.b16 %v98
    %v819 = vunpack.c.h.b16 %v98
    %v820 = vunpack.c.l.b16 %v99
    %v821 = vunpack.c.h.b16 %v99
    %v822 = vunpack.c.l.b16 %v100
    %v823 = vunpack.c.h.b16 %v100
    %v824 = vunpack.c.l.b16 %v101
    %v825 = vunpack.c.h.b16 %v101
    %v826 = vunpack.c.l.b16 %v102
    %v827 = vunpack.c.h.b16 %v102
    %v828 = vunpack.c.l.b16 %v103
    %v829 = vunpack.c.h.b16 %v103
    %v830 = vunpack.c.l.b16 %v104
    %v831 = vunpack.c.h.b16 %v104
    %v832 = vunpack.c.l.b16 %v105
    %v833 = vunpack.c.h.b16 %v105
    %v834 = vunpack.c.l.b16 %v106
    %v835 = vunpack.c.h.b16 %v106
    %v836 = vunpack.c.l.b16 %v107
    %v837 = vunpack.c.h.b16 %v107
    %v838 = vunpack.c.l.b16 %v108
    %v839 = vunpack.c.h.b16 %v108
    %v840 = vunpack.c.l.b16 %v109
    %v841 = vunpack.c.h.b16 %v109
    %v842 = vunpack.c.l.b16 %v110
    %v843 = vunpack.c.h.b16 %v110
    %v844 = vunpack.c.l.b16 %v111
    %v845 = vunpack.c.h.b16 %v111
    %v846 = vunpack.c.l.b16 %v112
    %v847 = vunpack.c.h.b16 %v112
    %v848 = vunpack.c.l.b16 %v113
    %v849 = vunpack.c.h.b16 %v113
    %v850 = vunpack.c.l.b16 %v114
    %v851 = vunpack.c.h.b16 %v114
    %v852 = vunpack.c.l.b16 %v115
    %v853 = vunpack.c.h.b16 %v115
    %v854 = vunpack.c.l.b16 %v116
    %v855 = vunpack.c.h.b16 %v116
    %v856 = vunpack.c.l.b16 %v117
    %v857 = vunpack.c.h.b16 %v117
    %v858 = vunpack.c.l.b16 %v118
    %v859 = vunpack.c.h.b16 %v118
    %v860 = vunpack.c.l.b16 %v119
    %v861 = vunpack.c.h.b16 %v119
    %v862 = vunpack.c.l.b16 %v120
    %v863 = vunpack.c.h.b16 %v120
    %v864 = vunpack.c.l.b16 %v121
    %v865 = vunpack.c.h.b16 %v121
    %v866 = vunpack.c.l.b16 %v122
    %v867 = vunpack.c.h.b16 %v122
    %v868 = vunpack.c.l.b16 %v123
    %v869 = vunpack.c.h.b16 %v123
    %v870 = vunpack.c.l.b16 %v124
    %v871 = vunpack.c.h.b16 %v124
    %v872 = vunpack.c.l.b16 %v125
    %v873 = vunpack.c.h.b16 %v125
    %v874 = vunpack.c.l.b16 %v126
    %v875 = vunpack.c.h.b16 %v126
    %v876 = vunpack.c.l.b16 %v127
    %v877 = vunpack.c.h.b16 %v127
    %v878 = vunpack.c.l.b16 %v128
    %v879 = vunpack.c.h.b16 %v128
    %v880 = vunpack.c.l.b16 %v129
    %v881 = vunpack.c.h.b16 %v129
    %v882 = vunpack.c.l.b16 %v130
    %v883 = vunpack.c.h.b16 %v130
    %v884 = vunpack.c.l.b16 %v131
    %v885 = vunpack.c.h.b16 %v131
    %v886 = vunpack.c.l.b16 %v132
    %v887 = vunpack.c.h.b16 %v132
    %v888 = vunpack.c.l.b16 %v133
    %v889 = vunpack.c.h.b16 %v133
    %v890 = vunpack.c.l.b16 %v134
    %v891 = vunpack.c.h.b16 %v134
    %v892 = vunpack.c.l.b16 %v135
    %v893 = vunpack.c.h.b16 %v135
    %v894 = vunpack.c.l.b16 %v136
    %v895 = vunpack.c.h.b16 %v136
    %v896 = vunpack.c.l.b16 %v137
    %v897 = vunpack.c.h.b16 %v137
    %v898 = vunpack.c.l.b16 %v138
    %v899 = vunpack.c.h.b16 %v138
    %v900 = vunpack.c.l.b16 %v139
    %v901 = vunpack.c.h.b16 %v139
    %v902 = vunpack.c.l.b16 %v140
    %v903 = vunpack.c.h.b16 %v140
    %v904 = vunpack.c.l.b16 %v141
    %v905 = vunpack.c.h.b16 %v141
    %v906 = vunpack.c.l.b16 %v142
    %v907 = vunpack.c.h.b16 %v142
    %v908 = vunpack.c.l.b16 %v143
    %v909 = vunpack.c.h.b16 %v143
    %v910 = vunpack.c.l.b16 %v144
    %v911 = vunpack.c.h.b16 %v144
    %v912 = vunpack.c.l.b16 %v145
    %v913 = vunpack.c.h.b16 %v145
    %v914 = vunpack.c.l.b16 %v146
    %v915 = vunpack.c.h.b16 %v146
    %v916 = vunpack.c.l.b16 %v147
    %v917 = vunpack.c.h.b16 %v147
    %v918 = vunpack.c.l.b16 %v148
    %v919 = vunpack.c.h.b16 %v148
    %v920 = vunpack.c.l.b16 %v149
    %v921 = vunpack.c.h.b16 %v149
    %v922 = vunpack.c.l.b16 %v150
    %v923 = vunpack.c.h.b16 %v150
    %v924 = vunpack.c.l.b16 %v151
    %v925 = vunpack.c.h.b16 %v151
    %v926 = vunpack.c.l.b16 %v152
    %v927 = vunpack.c.h.b16 %v152
    %v928 = vunpack.c.l.b16 %v153
    %v929 = vunpack.c.h.b16 %v153
    %v930 = vunpack.c.l.b16 %v154
    %v931 = vunpack.c.h.b16 %v154
    %v932 = vunpack.c.l.b16 %v155
    %v933 = vunpack.c.h.b16 %v155
    %v934 = vunpack.c.l.b16 %v156
    %v935 = vunpack.c.h.b16 %v156
    %v936 = vunpack.c.l.b16 %v157
    %v937 = vunpack.c.h.b16 %v157
    %v938 = vunpack.c.l.b16 %v158
    %v939 = vunpack.c.h.b16 %v158
    %v940 = vunpack.c.l.b16 %v159
    %v941 = vunpack.c.h.b16 %v159
    %v942 = vunpack.c.l.b16 %v160
    %v943 = vunpack.c.h.b16 %v160
    %v944 = vunpack.c.l.b16 %v161
    %v945 = vunpack.c.h.b16 %v161
    %v946 = vunpack.c.l.b16 %v162
    %v947 = vunpack.c.h.b16 %v162
    %v948 = vunpack.c.l.b16 %v163
    %v949 = vunpack.c.h.b16 %v163
    %v950 = vunpack.c.l.b16 %v164
    %v951 = vunpack.c.h.b16 %v164
    %v952 = vunpack.c.l.b16 %v165
    %v953 = vunpack.c.h.b16 %v165
    %v954 = vunpack.c.l.b16 %v166
    %v955 = vunpack.c.h.b16 %v166
    %v956 = vunpack.c.l.b16 %v167
    %v957 = vunpack.c.h.b16 %v167
    %v958 = vunpack.c.l.b16 %v168
    %v959 = vunpack.c.h.b16 %v168
    %v960 = vunpack.c.l.b16 %v169
    %v961 = vunpack.c.h.b16 %v169
    %v962 = vunpack.c.l.b16 %v170
    %v963 = vunpack.c.h.b16 %v170
    %v964 = vunpack.c.l.b16 %v171
    %v965 = vunpack.c.h.b16 %v171
    %v966 = vunpack.c.l.b16 %v172
    %v967 = vunpack.c.h.b16 %v172
    %v968 = vunpack.c.l.b16 %v173
    %v969 = vunpack.c.h.b16 %v173
    %v970 = vunpack.c.l.b16 %v174
    %v971 = vunpack.c.h.b16 %v174
    %v972 = vunpack.c.l.b16 %v175
    %v973 = vunpack.c.h.b16 %v175
    %v974 = vunpack.c.l.b16 %v176
    %v975 = vunpack.c.h.b16 %v176
    %v976 = vunpack.c.l.b16 %v177
    %v977 = vunpack.c.h.b16 %v177
    %v978 = vunpack.c.l.b16 %v178
    %v979 = vunpack.c.h.b16 %v178
    %v980 = vunpack.c.l.b16 %v179
    %v981 = vunpack.c.h.b16 %v179
    %v982 = vunpack.c.l.b16 %v180
    %v983 = vunpack.c.h.b16 %v180
    %v984 = vunpack.c.l.b16 %v181
    %v985 = vunpack.c.h.b16 %v181
    %v986 = vunpack.c.l.b16 %v182
    %v987 = vunpack.c.h.b16 %v182
    %v988 = vunpack.c.l.b16 %v183
    %v989 = vunpack.c.h.b16 %v183
    %v990 = vunpack.c.l.b16 %v184
    %v991 = vunpack.c.h.b16 %v184
    %v992 = vunpack.c.l.b16 %v185
    %v993 = vunpack.c.h.b16 %v185
    %v994 = vunpack.c.l.b16 %v186
    %v995 = vunpack.c.h.b16 %v186
    %v996 = vunpack.c.l.b16 %v187
    %v997 = vunpack.c.h.b16 %v187
    %v998 = vunpack.c.l.b16 %v188
    %v999 = vunpack.c.h.b16 %v188
    %v1000 = vunpack.c.l.b16 %v189
    %v1001 = vunpack.c.h.b16 %v189
    %v1002 = vunpack.c.l.b16 %v190
    %v1003 = vunpack.c.h.b16 %v190
    %v1004 = vunpack.c.l.b16 %v191
    %v1005 = vunpack.c.h.b16 %v191
    %v1006 = vunpack.c.l.b16 %v192
    %v1007 = vunpack.c.h.b16 %v192
    %v1008 = vunpack.c.l.b16 %v193
    %v1009 = vunpack.c.h.b16 %v193
    %v1010 = vunpack.c.l.b16 %v194
    %v1011 = vunpack.c.h.b16 %v194
    %v1012 = vunpack.c.l.b16 %v195
    %v1013 = vunpack.c.h.b16 %v195
    %v1014 = vunpack.c.l.b16 %v196
    %v1015 = vunpack.c.h.b16 %v196
    %v1016 = vunpack.c.l.b16 %v197
    %v1017 = vunpack.c.h.b16 %v197
    %v1018 = vunpack.c.l.b16 %v198
    %v1019 = vunpack.c.h.b16 %v198
    %v1020 = vunpack.c.l.b16 %v199
    %v1021 = vunpack.c.h.b16 %v199
    %v1022 = vunpack.c.l.b16 %v200
    %v1023 = vunpack.c.h.b16 %v200
    %v1024 = vunpack.c.l.b16 %v201
    %v1025 = vunpack.c.h.b16 %v201
    %v1026 = vunpack.c.l.b16 %v202
    %v1027 = vunpack.c.h.b16 %v202
    %v1028 = vunpack.c.l.b16 %v203
    %v1029 = vunpack.c.h.b16 %v203
    %v1030 = vunpack.c.l.b16 %v204
    %v1031 = vunpack.c.h.b16 %v204
    %v1032 = vunpack.c.l.b16 %v205
    %v1033 = vunpack.c.h.b16 %v205
    %v1034 = vunpack.c.l.b16 %v206
    %v1035 = vunpack.c.h.b16 %v206
    %v1036 = vunpack.c.l.b16 %v207
    %v1037 = vunpack.c.h.b16 %v207
    %v1038 = vunpack.c.l.b16 %v208
    %v1039 = vunpack.c.h.b16 %v208
    %v1040 = vunpack.c.l.b16 %v209
    %v1041 = vunpack.c.h.b16 %v209
    %v1042 = vunpack.c.l.b16 %v210
    %v1043 = vunpack.c.h.b16 %v210
    %v1044 = vunpack.c.l.b16 %v211
    %v1045 = vunpack.c.h.b16 %v211
    %v1046 = vunpack.c.l.b16 %v212
    %v1047 = vunpack.c.h.b16 %v212
    %v1048 = vunpack.c.l.b16 %v213
    %v1049 = vunpack.c.h.b16 %v213
    %v1050 = vunpack.c.l.b16 %v214
    %v1051 = vunpack.c.h.b16 %v214
    %v1052 = vunpack.c.l.b16 %v215
    %v1053 = vunpack.c.h.b16 %v215
    %v1054 = vunpack.c.l.b16 %v216
    %v1055 = vunpack.c.h.b16 %v216
    %v1056 = vunpack.c.l.b16 %v217
    %v1057 = vunpack.c.h.b16 %v217
    %v1058 = vunpack.c.l.b16 %v218
    %v1059 = vunpack.c.h.b16 %v218
    %v1060 = vunpack.c.l.b16 %v219
    %v1061 = vunpack.c.h.b16 %v219
    %v1062 = vunpack.c.l.b16 %v220
    %v1063 = vunpack.c.h.b16 %v220
    %v1064 = vunpack.c.l.b16 %v221
    %v1065 = vunpack.c.h.b16 %v221
    %v1066 = vunpack.c.l.b16 %v222
    %v1067 = vunpack.c.h.b16 %v222
    %v1068 = vunpack.c.l.b16 %v223
    %v1069 = vunpack.c.h.b16 %v223
    %v1070 = vunpack.c.l.b16 %v224
    %v1071 = vunpack.c.h.b16 %v224
    %v1072 = vunpack.c.l.b16 %v225
    %v1073 = vunpack.c.h.b16 %v225
    %v1074 = vunpack.c.l.b16 %v226
    %v1075 = vunpack.c.h.b16 %v226
    %v1076 = vunpack.c.l.b16 %v227
    %v1077 = vunpack.c.h.b16 %v227
    %v1078 = vunpack.c.l.b16 %v228
    %v1079 = vunpack.c.h.b16 %v228
    %v1080 = vunpack.c.l.b16 %v229
    %v1081 = vunpack.c.h.b16 %v229
    %v1082 = vunpack.c.l.b16 %v230
    %v1083 = vunpack.c.h.b16 %v230
    %v1084 = vunpack.c.l.b16 %v231
    %v1085 = vunpack.c.h.b16 %v231
    %v1086 = vunpack.c.l.b16 %v232
    %v1087 = vunpack.c.h.b16 %v232
    %v1088 = vunpack.c.l.b16 %v233
    %v1089 = vunpack.c.h.b16 %v233
    %v1090 = vunpack.c.l.b16 %v234
    %v1091 = vunpack.c.h.b16 %v234
    %v1092 = vunpack.c.l.b16 %v235
    %v1093 = vunpack.c.h.b16 %v235
    %v1094 = vunpack.c.l.b16 %v236
    %v1095 = vunpack.c.h.b16 %v236
    %v1096 = vunpack.c.l.b16 %v237
    %v1097 = vunpack.c.h.b16 %v237
    %v1098 = vunpack.c.l.b16 %v238
    %v1099 = vunpack.c.h.b16 %v238
    %v1100 = vunpack.c.l.b16 %v239
    %v1101 = vunpack.c.h.b16 %v239
    %v1102 = vunpack.c.l.b16 %v240
    %v1103 = vunpack.c.h.b16 %v240
    %v1104 = vunpack.c.l.b16 %v241
    %v1105 = vunpack.c.h.b16 %v241
    %v1106 = vunpack.c.l.b16 %v242
    %v1107 = vunpack.c.h.b16 %v242
    %v1108 = vunpack.c.l.b16 %v243
    %v1109 = vunpack.c.h.b16 %v243
    %v1110 = vunpack.c.l.b16 %v244
    %v1111 = vunpack.c.h.b16 %v244
    %v1112 = vunpack.c.l.b16 %v245
    %v1113 = vunpack.c.h.b16 %v245
    %v1114 = vunpack.c.l.b16 %v246
    %v1115 = vunpack.c.h.b16 %v246
    %v1116 = vunpack.c.l.b16 %v247
    %v1117 = vunpack.c.h.b16 %v247
    %v1118 = vunpack.c.l.b16 %v248
    %v1119 = vunpack.c.h.b16 %v248
    %v1120 = vunpack.c.l.b16 %v249
    %v1121 = vunpack.c.h.b16 %v249
    %v1122 = vunpack.c.l.b16 %v250
    %v1123 = vunpack.c.h.b16 %v250
    %v1124 = vunpack.c.l.b16 %v251
    %v1125 = vunpack.c.h.b16 %v251
    %v1126 = vunpack.c.l.b16 %v252
    %v1127 = vunpack.c.h.b16 %v252
    %v1128 = vunpack.c.l.b16 %v253
    %v1129 = vunpack.c.h.b16 %v253
    %v1130 = vunpack.c.l.b16 %v254
    %v1131 = vunpack.c.h.b16 %v254
    %v1132 = vunpack.c.l.b16 %v255
    %v1133 = vunpack.c.h.b16 %v255
    %v1134 = vunpack.c.l.b16 %v256
    %v1135 = vunpack.c.h.b16 %v256
    %v1136 = vunpack.c.l.b16 %v257
    %v1137 = vunpack.c.h.b16 %v257
    %v1138 = vunpack.c.l.b16 %v258
    %v1139 = vunpack.c.h.b16 %v258
    %v1140 = vunpack.c.l.b16 %v259
    %v1141 = vunpack.c.h.b16 %v259
    %v1142 = vunpack.c.l.b16 %v260
    %v1143 = vunpack.c.h.b16 %v260
    %v1144 = vunpack.c.l.b16 %v261
    %v1145 = vunpack.c.h.b16 %v261
    %v1146 = vunpack.c.l.b16 %v262
    %v1147 = vunpack.c.h.b16 %v262
    %v1148 = vunpack.c.l.b16 %v263
    %v1149 = vunpack.c.h.b16 %v263
    %v1150 = vunpack.c.l.b16 %v264
    %v1151 = vunpack.c.h.b16 %v264
    %v1152 = vunpack.c.l.b16 %v265
    %v1153 = vunpack.c.h.b16 %v265
    %v1154 = vunpack.c.l.b16 %v266
    %v1155 = vunpack.c.h.b16 %v266
    %v1156 = vunpack.c.l.b16 %v267
    %v1157 = vunpack.c.h.b16 %v267
    %v1158 = vunpack.c.l.b16 %v268
    %v1159 = vunpack.c.h.b16 %v268
    %v1160 = vunpack.c.l.b16 %v269
    %v1161 = vunpack.c.h.b16 %v269
    %v1162 = vunpack.c.l.b16 %v270
    %v1163 = vunpack.c.h.b16 %v270
    %v1164 = vunpack.c.l.b16 %v271
    %v1165 = vunpack.c.h.b16 %v271
    %v1166 = vunpack.c.l.b16 %v272
    %v1167 = vunpack.c.h.b16 %v272
    %v1168 = vunpack.c.l.b16 %v273
    %v1169 = vunpack.c.h.b16 %v273
    %v1170 = vunpack.c.l.b16 %v274
    %v1171 = vunpack.c.h.b16 %v274
    %v1172 = vunpack.c.l.b16 %v275
    %v1173 = vunpack.c.h.b16 %v275
    %v1174 = vunpack.c.l.b16 %v276
    %v1175 = vunpack.c.h.b16 %v276
    %v1176 = vunpack.c.l.b16 %v277
    %v1177 = vunpack.c.h.b16 %v277
    %v1178 = vunpack.c.l.b16 %v278
    %v1179 = vunpack.c.h.b16 %v278
    %v1180 = vunpack.c.l.b16 %v279
    %v1181 = vunpack.c.h.b16 %v279
    %v1182 = vunpack.c.l.b16 %v280
    %v1183 = vunpack.c.h.b16 %v280
    %v1184 = vunpack.c.l.b16 %v281
    %v1185 = vunpack.c.h.b16 %v281
    %v1186 = vunpack.c.l.b16 %v282
    %v1187 = vunpack.c.h.b16 %v282
    %v1188 = vunpack.c.l.b16 %v283
    %v1189 = vunpack.c.h.b16 %v283
    %v1190 = vunpack.c.l.b16 %v284
    %v1191 = vunpack.c.h.b16 %v284
    %v1192 = vunpack.c.l.b16 %v285
    %v1193 = vunpack.c.h.b16 %v285
    %v1194 = vunpack.c.l.b16 %v286
    %v1195 = vunpack.c.h.b16 %v286
    %v1196 = vunpack.c.l.b16 %v287
    %v1197 = vunpack.c.h.b16 %v287
    %v1198 = vunpack.c.l.b16 %v288
    %v1199 = vunpack.c.h.b16 %v288
    %v1200 = vunpack.c.l.b16 %v289
    %v1201 = vunpack.c.h.b16 %v289
    %v1202 = vunpack.c.l.b16 %v290
    %v1203 = vunpack.c.h.b16 %v290
    %v1204 = vunpack.c.l.b16 %v291
    %v1205 = vunpack.c.h.b16 %v291
    %v1206 = vunpack.c.l.b16 %v292
    %v1207 = vunpack.c.h.b16 %v292
    %v1208 = vunpack.c.l.b16 %v293
    %v1209 = vunpack.c.h.b16 %v293
    %v1210 = vunpack.c.l.b16 %v294
    %v1211 = vunpack.c.h.b16 %v294
    %v1212 = vunpack.c.l.b16 %v295
    %v1213 = vunpack.c.h.b16 %v295
    %v1214 = vunpack.c.l.b16 %v296
    %v1215 = vunpack.c.h.b16 %v296
    %v1216 = vunpack.c.l.b16 %v297
    %v1217 = vunpack.c.h.b16 %v297
    %v1218 = vunpack.c.l.b16 %v298
    %v1219 = vunpack.c.h.b16 %v298
    %v1220 = vunpack.c.l.b16 %v299
    %v1221 = vunpack.c.h.b16 %v299
    %v1222 = vunpack.c.l.b16 %v300
    %v1223 = vunpack.c.h.b16 %v300
    %v1224 = vunpack.c.l.b16 %v301
    %v1225 = vunpack.c.h.b16 %v301
    %v1226 = vunpack.c.l.b16 %v302
    %v1227 = vunpack.c.h.b16 %v302
    %v1228 = vunpack.c.l.b16 %v303
    %v1229 = vunpack.c.h.b16 %v303
    %v1230 = vunpack.c.l.b16 %v304
    %v1231 = vunpack.c.h.b16 %v304
    %v1232 = vunpack.c.l.b16 %v305
    %v1233 = vunpack.c.h.b16 %v305
    %v1234 = vunpack.c.l.b16 %v306
    %v1235 = vunpack.c.h.b16 %v306
    %v1236 = vunpack.c.l.b16 %v307
    %v1237 = vunpack.c.h.b16 %v307
    %v1238 = vunpack.c.l.b16 %v308
    %v1239 = vunpack.c.h.b16 %v308
    %v1240 = vunpack.c.l.b16 %v309
    %v1241 = vunpack.c.h.b16 %v309
    %v1242 = vunpack.c.l.b16 %v310
    %v1243 = vunpack.c.h.b16 %v310
    %v1244 = vunpack.c.l.b16 %v311
    %v1245 = vunpack.c.h.b16 %v311
    %v1246 = vunpack.c.l.b16 %v312
    %v1247 = vunpack.c.h.b16 %v312
    %v1248 = vunpack.c.l.b16 %v313
    %v1249 = vunpack.c.h.b16 %v313
    %v1250 = vunpack.c.l.b16 %v314
    %v1251 = vunpack.c.h.b16 %v314
    %v1252 = vunpack.c.l.b16 %v315
    %v1253 = vunpack.c.h.b16 %v315
    %v1254 = vunpack.c.l.b16 %v316
    %v1255 = vunpack.c.h.b16 %v316
    %v1256 = vunpack.c.l.b16 %v317
    %v1257 = vunpack.c.h.b16 %v317
    %v1258 = vunpack.c.l.b16 %v318
    %v1259 = vunpack.c.h.b16 %v318
    %v1260 = vunpack.c.l.b16 %v319
    %v1261 = vunpack.c.h.b16 %v319
    %v1262 = vpack.c.b16 %v754, %v750
    %v1263 = vpack.c.b16 %v755, %v751
    %v1264 = vpack.c.b16 %v756, %v752
    %v1265 = vpack.c.b16 %v757, %v753
    %v1266 = vpack.c.b16 %v762, %v758
    %v1267 = vpack.c.b16 %v763, %v759
    %v1268 = vpack.c.b16 %v764, %v760
    %v1269 = vpack.c.b16 %v765, %v761
    %v1270 = vpack.c.b16 %v770, %v766
    %v1271 = vpack.c.b16 %v771, %v767
    %v1272 = vpack.c.b16 %v772, %v768
    %v1273 = vpack.c.b16 %v773, %v769
    %v1274 = vpack.c.b16 %v778, %v774
    %v1275 = vpack.c.b16 %v779, %v775
    %v1276 = vpack.c.b16 %v780, %v776
    %v1277 = vpack.c.b16 %v781, %v777
    %v1278 = vpack.c.b16 %v786, %v782
    %v1279 = vpack.c.b16 %v787, %v783
    %v1280 = vpack.c.b16 %v788, %v784
    %v1281 = vpack.c.b16 %v789, %v785
    %v1282 = vpack.c.b16 %v794, %v790
    %v1283 = vpack.c.b16 %v795, %v791
    %v1284 = vpack.c.b16 %v796, %v792
    %v1285 = vpack.c.b16 %v797, %v793
    %v1286 = vpack.c.b16 %v802, %v798
    %v1287 = vpack.c.b16 %v803, %v799
    %v1288 = vpack.c.b16 %v804, %v800
    %v1289 = vpack.c.b16 %v805, %v801
    %v1290 = vpack.c.b16 %v810, %v806
    %v1291 = vpack.c.b16 %v811, %v807
    %v1292 = vpack.c.b16 %v812, %v808
    %v1293 = vpack.c.b16 %v813, %v809
    %v1294 = vpack.c.b16 %v818, %v814
    %v1295 = vpack.c.b16 %v819, %v815
    %v1296 = vpack.c.b16 %v820, %v816
    %v1297 = vpack.c.b16 %v821, %v817
    %v1298 = vpack.c.b16 %v826, %v822
    %v1299 = vpack.c.b16 %v827, %v823
    %v1300 = vpack.c.b16 %v828, %v824
    %v1301 = vpack.c.b16 %v829, %v825
    %v1302 = vpack.c.b16 %v834, %v830
    %v1303 = vpack.c.b16 %v835, %v831
    %v1304 = vpack.c.b16 %v836, %v832
    %v1305 = vpack.c.b16 %v837, %v833
    %v1306 = vpack.c.b16 %v842, %v838
    %v1307 = vpack.c.b16 %v843, %v839
    %v1308 = vpack.c.b16 %v844, %v840
    %v1309 = vpack.c.b16 %v845, %v841
    %v1310 = vpack.c.b16 %v850, %v846
    %v1311 = vpack.c.b16 %v851, %v847
    %v1312 = vpack.c.b16 %v852, %v848
    %v1313 = vpack.c.b16 %v853, %v849
    %v1314 = vpack.c.b16 %v858, %v854
    %v1315 = vpack.c.b16 %v859, %v855
    %v1316 = vpack.c.b16 %v860, %v856
    %v1317 = vpack.c.b16 %v861, %v857
    %v1318 = vpack.c.b16 %v866, %v862
    %v1319 = vpack.c.b16 %v867, %v863
    %v1320 = vpack.c.b16 %v868, %v864
    %v1321 = vpack.c.b16 %v869, %v865
    %v1322 = vpack.c.b16 %v874, %v870
    %v1323 = vpack.c.b16 %v875, %v871
    %v1324 = vpack.c.b16 %v876, %v872
    %v1325 = vpack.c.b16 %v877, %v873
    %v1326 = vpack.c.b16 %v882, %v878
    %v1327 = vpack.c.b16 %v883, %v879
    %v1328 = vpack.c.b16 %v884, %v880
    %v1329 = vpack.c.b16 %v885, %v881
    %v1330 = vpack.c.b16 %v890, %v886
    %v1331 = vpack.c.b16 %v891, %v887
    %v1332 = vpack.c.b16 %v892, %v888
    %v1333 = vpack.c.b16 %v893, %v889
    %v1334 = vpack.c.b16 %v898, %v894
    %v1335 = vpack.c.b16 %v899, %v895
    %v1336 = vpack.c.b16 %v900, %v896
    %v1337 = vpack.c.b16 %v901, %v897
    %v1338 = vpack.c.b16 %v906, %v902
    %v1339 = vpack.c.b16 %v907, %v903
    %v1340 = vpack.c.b16 %v908, %v904
    %v1341 = vpack.c.b16 %v909, %v905
    %v1342 = vpack.c.b16 %v914, %v910
    %v1343 = vpack.c.b16 %v915, %v911
    %v1344 = vpack.c.b16 %v916, %v912
    %v1345 = vpack.c.b16 %v917, %v913
    %v1346 = vpack.c.b16 %v922, %v918
    %v1347 = vpack.c.b16 %v923, %v919
    %v1348 = vpack.c.b16 %v924, %v920
    %v1349 = vpack.c.b16 %v925, %v921
    %v1350 = vpack.c.b16 %v930, %v926
    %v1351 = vpack.c.b16 %v931, %v927
    %v1352 = vpack.c.b16 %v932, %v928
    %v1353 = vpack.c.b16 %v933, %v929
    %v1354 = vpack.c.b16 %v938, %v934
    %v1355 = vpack.c.b16 %v939, %v935
    %v1356 = vpack.c.b16 %v940, %v936
    %v1357 = vpack.c.b16 %v941, %v937
    %v1358 = vpack.c.b16 %v946, %v942
    %v1359 = vpack.c.b16 %v947, %v943
    %v1360 = vpack.c.b16 %v948, %v944
    %v1361 = vpack.c.b16 %v949, %v945
    %v1362 = vpack.c.b16 %v954, %v950
    %v1363 = vpack.c.b16 %v955, %v951
    %v1364 = vpack.c.b16 %v956, %v952
    %v1365 = vpack.c.b16 %v957, %v953
    %v1366 = vpack.c.b16 %v962, %v958
    %v1367 = vpack.c.b16 %v963, %v959
    %v1368 = vpack.c.b16 %v964, %v960
    %v1369 = vpack.c.b16 %v965, %v961
    %v1370 = vpack.c.b16 %v970, %v966
    %v1371 = vpack.c.b16 %v971, %v967
    %v1372 = vpack.c.b16 %v972, %v968
    %v1373 = vpack.c.b16 %v973, %v969
    %v1374 = vpack.c.b16 %v978, %v974
    %v1375 = vpack.c.b16 %v979, %v975
    %v1376 = vpack.c.b16 %v980, %v976
    %v1377 = vpack.c.b16 %v981, %v977
    %v1378 = vpack.c.b16 %v986, %v982
    %v1379 = vpack.c.b16 %v987, %v983
    %v1380 = vpack.c.b16 %v988, %v984
    %v1381 = vpack.c.b16 %v989, %v985
    %v1382 = vpack.c.b16 %v994, %v990
    %v1383 = vpack.c.b16 %v995, %v991
    %v1384 = vpack.c.b16 %v996, %v992
    %v1385 = vpack.c.b16 %v997, %v993
    %v1386 = vpack.c.b16 %v1002, %v998
    %v1387 = vpack.c.b16 %v1003, %v999
    %v1388 = vpack.c.b16 %v1004, %v1000
    %v1389 = vpack.c.b16 %v1005, %v1001
    %v1390 = vpack.c.b16 %v1010, %v1006
    %v1391 = vpack.c.b16 %v1011, %v1007
    %v1392 = vpack.c.b16 %v1012, %v1008
    %v1393 = vpack.c.b16 %v1013, %v1009
    %v1394 = vpack.c.b16 %v1018, %v1014
    %v1395 = vpack.c.b16 %v1019, %v1015
    %v1396 = vpack.c.b16 %v1020, %v1016
    %v1397 = vpack.c.b16 %v1021, %v1017
    %v1398 = vpack.c.b16 %v1026, %v1022
    %v1399 = vpack.c.b16 %v1027, %v1023
    %v1400 = vpack.c.b16 %v1028, %v1024
    %v1401 = vpack.c.b16 %v1029, %v1025
    %v1402 = vpack.c.b16 %v1034, %v1030
    %v1403 = vpack.c.b16 %v1035, %v1031
    %v1404 = vpack.c.b16 %v1036, %v1032
    %v1405 = vpack.c.b16 %v1037, %v1033
    %v1406 = vpack.c.b16 %v1042, %v1038
    %v1407 = vpack.c.b16 %v1043, %v1039
    %v1408 = vpack.c.b16 %v1044, %v1040
    %v1409 = vpack.c.b16 %v1045, %v1041
    %v1410 = vpack.c.b16 %v1050, %v1046
    %v1411 = vpack.c.b16 %v1051, %v1047
    %v1412 = vpack.c.b16 %v1052, %v1048
    %v1413 = vpack.c.b16 %v1053, %v1049
    %v1414 = vpack.c.b16 %v1058, %v1054
    %v1415 = vpack.c.b16 %v1059, %v1055
    %v1416 = vpack.c.b16 %v1060, %v1056
    %v1417 = vpack.c.b16 %v1061, %v1057
    %v1418 = vpack.c.b16 %v1066, %v1062
    %v1419 = vpack.c.b16 %v1067, %v1063
    %v1420 = vpack.c.b16 %v1068, %v1064
    %v1421 = vpack.c.b16 %v1069, %v1065
    %v1422 = vpack.c.b16 %v1074, %v1070
    %v1423 = vpack.c.b16 %v1075, %v1071
    %v1424 = vpack.c.b16 %v1076, %v1072
    %v1425 = vpack.c.b16 %v1077, %v1073
    %v1426 = vpack.c.b16 %v1082, %v1078
    %v1427 = vpack.c.b16 %v1083, %v1079
    %v1428 = vpack.c.b16 %v1084, %v1080
    %v1429 = vpack.c.b16 %v1085, %v1081
    %v1430 = vpack.c.b16 %v1090, %v1086
    %v1431 = vpack.c.b16 %v1091, %v1087
    %v1432 = vpack.c.b16 %v1092, %v1088
    %v1433 = vpack.c.b16 %v1093, %v1089
    %v1434 = vpack.c.b16 %v1098, %v1094
    %v1435 = vpack.c.b16 %v1099, %v1095
    %v1436 = vpack.c.b16 %v1100, %v1096
    %v1437 = vpack.c.b16 %v1101, %v1097
    %v1438 = vpack.c.b16 %v1106, %v1102
    %v1439 = vpack.c.b16 %v1107, %v1103
    %v1440 = vpack.c.b16 %v1108, %v1104
    %v1441 = vpack.c.b16 %v1109, %v1105
    %v1442 = vpack.c.b16 %v1114, %v1110
    %v1443 = vpack.c.b16 %v1115, %v1111
    %v1444 = vpack.c.b16 %v1116, %v1112
    %v1445 = vpack.c.b16 %v1117, %v1113
    %v1446 = vpack.c.b16 %v1122, %v1118
    %v1447 = vpack.c.b16 %v1123, %v1119
    %v1448 = vpack.c.b16 %v1124, %v1120
    %v1449 = vpack.c.b16 %v1125, %v1121
    %v1450 = vpack.c.b16 %v1130, %v1126
    %v1451 = vpack.c.b16 %v1131, %v1127
    %v1452 = vpack.c.b16 %v1132, %v1128
    %v1453 = vpack.c.b16 %v1133, %v1129
    %v1454 = vpack.c.b16 %v1138, %v1134
    %v1455 = vpack.c.b16 %v1139, %v1135
    %v1456 = vpack.c.b16 %v1140, %v1136
    %v1457 = vpack.c.b16 %v1141, %v1137
    %v1458 = vpack.c.b16 %v1146, %v1142
    %v1459 = vpack.c.b16 %v1147, %v1143
    %v1460 = vpack.c.b16 %v1148, %v1144
    %v1461 = vpack.c.b16 %v1149, %v1145
    %v1462 = vpack.c.b16 %v1154, %v1150
    %v1463 = vpack.c.b16 %v1155, %v1151
    %v1464 = vpack.c.b16 %v1156, %v1152
    %v1465 = vpack.c.b16 %v1157, %v1153
    %v1466 = vpack.c.b16 %v1162, %v1158
    %v1467 = vpack.c.b16 %v1163, %v1159
    %v1468 = vpack.c.b16 %v1164, %v1160
    %v1469 = vpack.c.b16 %v1165, %v1161
    %v1470 = vpack.c.b16 %v1170, %v1166
    %v1471 = vpack.c.b16 %v1171, %v1167
    %v1472 = vpack.c.b16 %v1172, %v1168
    %v1473 = vpack.c.b16 %v1173, %v1169
    %v1474 = vpack.c.b16 %v1178, %v1174
    %v1475 = vpack.c.b16 %v1179, %v1175
    %v1476 = vpack.c.b16 %v1180, %v1176
    %v1477 = vpack.c.b16 %v1181, %v1177
    %v1478 = vpack.c.b16 %v1186, %v1182
    %v1479 = vpack.c.b16 %v1187, %v1183
    %v1480 = vpack.c.b16 %v1188, %v1184
    %v1481 = vpack.c.b16 %v1189, %v1185
    %v1482 = vpack.c.b16 %v1194, %v1190
    %v1483 = vpack.c.b16 %v1195, %v1191
    %v1484 = vpack.c.b16 %v1196, %v1192
    %v1485 = vpack.c.b16 %v1197, %v1193
    %v1486 = vpack.c.b16 %v1202, %v1198
    %v1487 = vpack.c.b16 %v1203, %v1199
    %v1488 = vpack.c.b16 %v1204, %v1200
    %v1489 = vpack.c.b16 %v1205, %v1201
    %v1490 = vpack.c.b16 %v1210, %v1206
    %v1491 = vpack.c.b16 %v1211, %v1207
    %v1492 = vpack.c.b16 %v1212, %v1208
    %v1493 = vpack.c.b16 %v1213, %v1209
    %v1494 = vpack.c.b16 %v1218, %v1214
    %v1495 = vpack.c.b16 %v1219, %v1215
    %v1496 = vpack.c.b16 %v1220, %v1216
    %v1497 = vpack.c.b16 %v1221, %v1217
    %v1498 = vpack.c.b16 %v1226, %v1222
    %v1499 = vpack.c.b16 %v1227, %v1223
    %v1500 = vpack.c.b16 %v1228, %v1224
    %v1501 = vpack.c.b16 %v1229, %v1225
    %v1502 = vpack.c.b16 %v1234, %v1230
    %v1503 = vpack.c.b16 %v1235, %v1231
    %v1504 = vpack.c.b16 %v1236, %v1232
    %v1505 = vpack.c.b16 %v1237, %v1233
    %v1506 = vpack.c.b16 %v1242, %v1238
    %v1507 = vpack.c.b16 %v1243, %v1239
    %v1508 = vpack.c.b16 %v1244, %v1240
    %v1509 = vpack.c.b16 %v1245, %v1241
    %v1510 = vpack.c.b16 %v1250, %v1246
    %v1511 = vpack.c.b16 %v1251, %v1247
    %v1512 = vpack.c.b16 %v1252, %v1248
    %v1513 = vpack.c.b16 %v1253, %v1249
    %v1514 = vpack.c.b16 %v1258, %v1254
    %v1515 = vpack.c.b16 %v1259, %v1255
    %v1516 = vpack.c.b16 %v1260, %v1256
    %v1517 = vpack.c.b16 %v1261, %v1257
    %1774 = vmatprep.subr.bf16.mxu0 %v1291
    %1775 = vmatpush1.bf16.msra.mxu0 %v1290
    %1776 = vmatprep.subr.bf16.mxu0 %v1287
    %1777 = vmatpush1.bf16.msra.mxu0 %v1286
    %1778 = vmatprep.subr.bf16.mxu0 %v1283
    %1779 = vmatpush1.bf16.msra.mxu0 %v1282
    %1780 = vmatprep.subr.bf16.mxu0 %v1279
    %1781 = vmatpush1.bf16.msra.mxu0 %v1278
    %1782 = vmatprep.subr.bf16.mxu0 %v1275
    %1783 = vmatpush1.bf16.msra.mxu0 %v1274
    %1784 = vmatprep.subr.bf16.mxu0 %v1271
    %1785 = vmatpush1.bf16.msra.mxu0 %v1270
    %1786 = vmatprep.subr.bf16.mxu0 %v1267
    %1787 = vmatpush1.bf16.msra.mxu0 %v1266
    %1788 = vmatprep.subr.bf16.mxu0 %v1263
    %1789 = vmatpush1.bf16.msra.mxu0 %v1262
    %1790 = vmatprep.subr.bf16.mxu0 %v1323
    %1791 = vmatpush2.bf16.msra.mxu0 %v1322
    %1792 = vmatprep.subr.bf16.mxu0 %v1319
    %1793 = vmatpush2.bf16.msra.mxu0 %v1318
    %1794 = vmatprep.subr.bf16.mxu0 %v1315
    %1795 = vmatpush2.bf16.msra.mxu0 %v1314
    %1796 = vmatprep.subr.bf16.mxu0 %v1311
    %1797 = vmatpush2.bf16.msra.mxu0 %v1310
    %1798 = vmatprep.subr.bf16.mxu0 %v1307
    %1799 = vmatpush2.bf16.msra.mxu0 %v1306
    %1800 = vmatprep.subr.bf16.mxu0 %v1303
    %1801 = vmatpush2.bf16.msra.mxu0 %v1302
    %1802 = vmatprep.subr.bf16.mxu0 %v1299
    %1803 = vmatpush2.bf16.msra.mxu0 %v1298
    %1804 = vmatprep.subr.bf16.mxu0 %v1295
    %1805 = vmatpush2.bf16.msra.mxu0 %v1294
    %1806 = vmatprep.mubr.bf16.mxu0 %v482
    %1807 = vmatmul.mubr.bf16.gmra.mxu0 %v478
    %v1808 = vpop.f32.mrf.mxu0
    %v1809 = vadd.f32 %v325, %v1808
    %v1810 = vpop.f32.mrf.mxu0
    %v1811 = vadd.f32 %v329, %v1810
    %v1812 = vpop.f32.mrf.mxu0
    %v1813 = vadd.f32 %v325, %v1812
    %v1814 = vpop.f32.mrf.mxu0
    %v1815 = vadd.f32 %v329, %v1814
    %1816 = vdwg.mxu0
    %1817 = vmatprep.subr.bf16.mxu0 %v1355
    %1818 = vmatpush1.bf16.msra.mxu0 %v1354
    %1819 = vmatprep.subr.bf16.mxu0 %v1351
    %1820 = vmatpush1.bf16.msra.mxu0 %v1350
    %1821 = vmatprep.subr.bf16.mxu0 %v1347
    %1822 = vmatpush1.bf16.msra.mxu0 %v1346
    %1823 = vmatprep.subr.bf16.mxu0 %v1343
    %1824 = vmatpush1.bf16.msra.mxu0 %v1342
    %1825 = vmatprep.subr.bf16.mxu0 %v1339
    %1826 = vmatpush1.bf16.msra.mxu0 %v1338
    %1827 = vmatprep.subr.bf16.mxu0 %v1335
    %1828 = vmatpush1.bf16.msra.mxu0 %v1334
    %1829 = vmatprep.subr.bf16.mxu0 %v1331
    %1830 = vmatpush1.bf16.msra.mxu0 %v1330
    %1831 = vmatprep.subr.bf16.mxu0 %v1327
    %1832 = vmatpush1.bf16.msra.mxu0 %v1326
    %1833 = vmatprep.subr.bf16.mxu0 %v1387
    %1834 = vmatpush2.bf16.msra.mxu0 %v1386
    %1835 = vmatprep.subr.bf16.mxu0 %v1383
    %1836 = vmatpush2.bf16.msra.mxu0 %v1382
    %1837 = vmatprep.subr.bf16.mxu0 %v1379
    %1838 = vmatpush2.bf16.msra.mxu0 %v1378
    %1839 = vmatprep.subr.bf16.mxu0 %v1375
    %1840 = vmatpush2.bf16.msra.mxu0 %v1374
    %1841 = vmatprep.subr.bf16.mxu0 %v1371
    %1842 = vmatpush2.bf16.msra.mxu0 %v1370
    %1843 = vmatprep.subr.bf16.mxu0 %v1367
    %1844 = vmatpush2.bf16.msra.mxu0 %v1366
    %1845 = vmatprep.subr.bf16.mxu0 %v1363
    %1846 = vmatpush2.bf16.msra.mxu0 %v1362
    %1847 = vmatprep.subr.bf16.mxu0 %v1359
    %1848 = vmatpush2.bf16.msra.mxu0 %v1358
    %1849 = vmatprep.mubr.bf16.mxu0 %v483
    %1850 = vmatmul.mubr.bf16.gmra.mxu0 %v479
    %v1851 = vpop.f32.mrf.mxu0
    %v1852 = vadd.f32 %v1809, %v1851
    %v1853 = vpop.f32.mrf.mxu0
    %v1854 = vadd.f32 %v1811, %v1853
    %v1855 = vpop.f32.mrf.mxu0
    %v1856 = vadd.f32 %v1813, %v1855
    %v1857 = vpop.f32.mrf.mxu0
    %v1858 = vadd.f32 %v1815, %v1857
    %1859 = vdwg.mxu0
    %1860 = vmatprep.subr.bf16.mxu0 %v1419
    %1861 = vmatpush1.bf16.msra.mxu0 %v1418
    %1862 = vmatprep.subr.bf16.mxu0 %v1415
    %1863 = vmatpush1.bf16.msra.mxu0 %v1414
    %1864 = vmatprep.subr.bf16.mxu0 %v1411
    %1865 = vmatpush1.bf16.msra.mxu0 %v1410
    %1866 = vmatprep.subr.bf16.mxu0 %v1407
    %1867 = vmatpush1.bf16.msra.mxu0 %v1406
    %1868 = vmatprep.subr.bf16.mxu0 %v1403
    %1869 = vmatpush1.bf16.msra.mxu0 %v1402
    %1870 = vmatprep.subr.bf16.mxu0 %v1399
    %1871 = vmatpush1.bf16.msra.mxu0 %v1398
    %1872 = vmatprep.subr.bf16.mxu0 %v1395
    %1873 = vmatpush1.bf16.msra.mxu0 %v1394
    %1874 = vmatprep.subr.bf16.mxu0 %v1391
    %1875 = vmatpush1.bf16.msra.mxu0 %v1390
    %1876 = vmatprep.subr.bf16.mxu0 %v1451
    %1877 = vmatpush2.bf16.msra.mxu0 %v1450
    %1878 = vmatprep.subr.bf16.mxu0 %v1447
    %1879 = vmatpush2.bf16.msra.mxu0 %v1446
    %1880 = vmatprep.subr.bf16.mxu0 %v1443
    %1881 = vmatpush2.bf16.msra.mxu0 %v1442
    %1882 = vmatprep.subr.bf16.mxu0 %v1439
    %1883 = vmatpush2.bf16.msra.mxu0 %v1438
    %1884 = vmatprep.subr.bf16.mxu0 %v1435
    %1885 = vmatpush2.bf16.msra.mxu0 %v1434
    %1886 = vmatprep.subr.bf16.mxu0 %v1431
    %1887 = vmatpush2.bf16.msra.mxu0 %v1430
    %1888 = vmatprep.subr.bf16.mxu0 %v1427
    %1889 = vmatpush2.bf16.msra.mxu0 %v1426
    %1890 = vmatprep.subr.bf16.mxu0 %v1423
    %1891 = vmatpush2.bf16.msra.mxu0 %v1422
    %1892 = vmatprep.mubr.bf16.mxu0 %v484
    %1893 = vmatmul.mubr.bf16.gmra.mxu0 %v480
    %v1894 = vpop.f32.mrf.mxu0
    %v1895 = vadd.f32 %v1852, %v1894
    %v1896 = vpop.f32.mrf.mxu0
    %v1897 = vadd.f32 %v1854, %v1896
    %v1898 = vpop.f32.mrf.mxu0
    %v1899 = vadd.f32 %v1856, %v1898
    %v1900 = vpop.f32.mrf.mxu0
    %v1901 = vadd.f32 %v1858, %v1900
    %1902 = vdwg.mxu0
    %1903 = vmatprep.subr.bf16.mxu0 %v1483
    %1904 = vmatpush1.bf16.msra.mxu0 %v1482
    %1905 = vmatprep.subr.bf16.mxu0 %v1479
    %1906 = vmatpush1.bf16.msra.mxu0 %v1478
    %1907 = vmatprep.subr.bf16.mxu0 %v1475
    %1908 = vmatpush1.bf16.msra.mxu0 %v1474
    %1909 = vmatprep.subr.bf16.mxu0 %v1471
    %1910 = vmatpush1.bf16.msra.mxu0 %v1470
    %1911 = vmatprep.subr.bf16.mxu0 %v1467
    %1912 = vmatpush1.bf16.msra.mxu0 %v1466
    %1913 = vmatprep.subr.bf16.mxu0 %v1463
    %1914 = vmatpush1.bf16.msra.mxu0 %v1462
    %1915 = vmatprep.subr.bf16.mxu0 %v1459
    %1916 = vmatpush1.bf16.msra.mxu0 %v1458
    %1917 = vmatprep.subr.bf16.mxu0 %v1455
    %1918 = vmatpush1.bf16.msra.mxu0 %v1454
    %1919 = vmatprep.subr.bf16.mxu0 %v1515
    %1920 = vmatpush2.bf16.msra.mxu0 %v1514
    %1921 = vmatprep.subr.bf16.mxu0 %v1511
    %1922 = vmatpush2.bf16.msra.mxu0 %v1510
    %1923 = vmatprep.subr.bf16.mxu0 %v1507
    %1924 = vmatpush2.bf16.msra.mxu0 %v1506
    %1925 = vmatprep.subr.bf16.mxu0 %v1503
    %1926 = vmatpush2.bf16.msra.mxu0 %v1502
    %1927 = vmatprep.subr.bf16.mxu0 %v1499
    %1928 = vmatpush2.bf16.msra.mxu0 %v1498
    %1929 = vmatprep.subr.bf16.mxu0 %v1495
    %1930 = vmatpush2.bf16.msra.mxu0 %v1494
    %1931 = vmatprep.subr.bf16.mxu0 %v1491
    %1932 = vmatpush2.bf16.msra.mxu0 %v1490
    %1933 = vmatprep.subr.bf16.mxu0 %v1487
    %1934 = vmatpush2.bf16.msra.mxu0 %v1486
    %1935 = vmatprep.mubr.bf16.mxu0 %v485
    %1936 = vmatmul.mubr.bf16.gmra.mxu0 %v481
    %v1937 = vpop.f32.mrf.mxu0
    %v1938 = vadd.f32 %v1895, %v1937
    %v1939 = vpop.f32.mrf.mxu0
    %v1940 = vadd.f32 %v1897, %v1939
    %v1941 = vpop.f32.mrf.mxu0
    %v1942 = vadd.f32 %v1899, %v1941
    %v1943 = vpop.f32.mrf.mxu0
    %v1944 = vadd.f32 %v1901, %v1943
    %1945 = vdwg.mxu0
    %1946 = vmatprep.subr.bf16.mxu0 %v1293
    %1947 = vmatpush1.bf16.msra.mxu0 %v1292
    %1948 = vmatprep.subr.bf16.mxu0 %v1289
    %1949 = vmatpush1.bf16.msra.mxu0 %v1288
    %1950 = vmatprep.subr.bf16.mxu0 %v1285
    %1951 = vmatpush1.bf16.msra.mxu0 %v1284
    %1952 = vmatprep.subr.bf16.mxu0 %v1281
    %1953 = vmatpush1.bf16.msra.mxu0 %v1280
    %1954 = vmatprep.subr.bf16.mxu0 %v1277
    %1955 = vmatpush1.bf16.msra.mxu0 %v1276
    %1956 = vmatprep.subr.bf16.mxu0 %v1273
    %1957 = vmatpush1.bf16.msra.mxu0 %v1272
    %1958 = vmatprep.subr.bf16.mxu0 %v1269
    %1959 = vmatpush1.bf16.msra.mxu0 %v1268
    %1960 = vmatprep.subr.bf16.mxu0 %v1265
    %1961 = vmatpush1.bf16.msra.mxu0 %v1264
    %1962 = vmatprep.subr.bf16.mxu0 %v1325
    %1963 = vmatpush2.bf16.msra.mxu0 %v1324
    %1964 = vmatprep.subr.bf16.mxu0 %v1321
    %1965 = vmatpush2.bf16.msra.mxu0 %v1320
    %1966 = vmatprep.subr.bf16.mxu0 %v1317
    %1967 = vmatpush2.bf16.msra.mxu0 %v1316
    %1968 = vmatprep.subr.bf16.mxu0 %v1313
    %1969 = vmatpush2.bf16.msra.mxu0 %v1312
    %1970 = vmatprep.subr.bf16.mxu0 %v1309
    %1971 = vmatpush2.bf16.msra.mxu0 %v1308
    %1972 = vmatprep.subr.bf16.mxu0 %v1305
    %1973 = vmatpush2.bf16.msra.mxu0 %v1304
    %1974 = vmatprep.subr.bf16.mxu0 %v1301
    %1975 = vmatpush2.bf16.msra.mxu0 %v1300
    %1976 = vmatprep.subr.bf16.mxu0 %v1297
    %1977 = vmatpush2.bf16.msra.mxu0 %v1296
    %1978 = vmatprep.mubr.bf16.mxu0 %v482
    %1979 = vmatmul.mubr.bf16.gmra.mxu0 %v478
    %v1980 = vpop.f32.mrf.mxu0
    %v1981 = vadd.f32 %v333, %v1980
    %v1982 = vpop.f32.mrf.mxu0
    %v1983 = vadd.f32 %v337, %v1982
    %v1984 = vpop.f32.mrf.mxu0
    %v1985 = vadd.f32 %v333, %v1984
    %v1986 = vpop.f32.mrf.mxu0
    %v1987 = vadd.f32 %v337, %v1986
    %1988 = vdwg.mxu0
    %1989 = vmatprep.subr.bf16.mxu0 %v1357
    %1990 = vmatpush1.bf16.msra.mxu0 %v1356
    %1991 = vmatprep.subr.bf16.mxu0 %v1353
    %1992 = vmatpush1.bf16.msra.mxu0 %v1352
    %1993 = vmatprep.subr.bf16.mxu0 %v1349
    %1994 = vmatpush1.bf16.msra.mxu0 %v1348
    %1995 = vmatprep.subr.bf16.mxu0 %v1345
    %1996 = vmatpush1.bf16.msra.mxu0 %v1344
    %1997 = vmatprep.subr.bf16.mxu0 %v1341
    %1998 = vmatpush1.bf16.msra.mxu0 %v1340
    %1999 = vmatprep.subr.bf16.mxu0 %v1337
    %2000 = vmatpush1.bf16.msra.mxu0 %v1336
    %2001 = vmatprep.subr.bf16.mxu0 %v1333
    %2002 = vmatpush1.bf16.msra.mxu0 %v1332
    %2003 = vmatprep.subr.bf16.mxu0 %v1329
    %2004 = vmatpush1.bf16.msra.mxu0 %v1328
    %2005 = vmatprep.subr.bf16.mxu0 %v1389
    %2006 = vmatpush2.bf16.msra.mxu0 %v1388
    %2007 = vmatprep.subr.bf16.mxu0 %v1385
    %2008 = vmatpush2.bf16.msra.mxu0 %v1384
    %2009 = vmatprep.subr.bf16.mxu0 %v1381
    %2010 = vmatpush2.bf16.msra.mxu0 %v1380
    %2011 = vmatprep.subr.bf16.mxu0 %v1377
    %2012 = vmatpush2.bf16.msra.mxu0 %v1376
    %2013 = vmatprep.subr.bf16.mxu0 %v1373
    %2014 = vmatpush2.bf16.msra.mxu0 %v1372
    %2015 = vmatprep.subr.bf16.mxu0 %v1369
    %2016 = vmatpush2.bf16.msra.mxu0 %v1368
    %2017 = vmatprep.subr.bf16.mxu0 %v1365
    %2018 = vmatpush2.bf16.msra.mxu0 %v1364
    %2019 = vmatprep.subr.bf16.mxu0 %v1361
    %2020 = vmatpush2.bf16.msra.mxu0 %v1360
    %2021 = vmatprep.mubr.bf16.mxu0 %v483
    %2022 = vmatmul.mubr.bf16.gmra.mxu0 %v479
    %v2023 = vpop.f32.mrf.mxu0
    %v2024 = vadd.f32 %v1981, %v2023
    %v2025 = vpop.f32.mrf.mxu0
    %v2026 = vadd.f32 %v1983, %v2025
    %v2027 = vpop.f32.mrf.mxu0
    %v2028 = vadd.f32 %v1985, %v2027
    %v2029 = vpop.f32.mrf.mxu0
    %v2030 = vadd.f32 %v1987, %v2029
    %2031 = vdwg.mxu0
    %2032 = vmatprep.subr.bf16.mxu0 %v1421
    %2033 = vmatpush1.bf16.msra.mxu0 %v1420
    %2034 = vmatprep.subr.bf16.mxu0 %v1417
    %2035 = vmatpush1.bf16.msra.mxu0 %v1416
    %2036 = vmatprep.subr.bf16.mxu0 %v1413
    %2037 = vmatpush1.bf16.msra.mxu0 %v1412
    %2038 = vmatprep.subr.bf16.mxu0 %v1409
    %2039 = vmatpush1.bf16.msra.mxu0 %v1408
    %2040 = vmatprep.subr.bf16.mxu0 %v1405
    %2041 = vmatpush1.bf16.msra.mxu0 %v1404
    %2042 = vmatprep.subr.bf16.mxu0 %v1401
    %2043 = vmatpush1.bf16.msra.mxu0 %v1400
    %2044 = vmatprep.subr.bf16.mxu0 %v1397
    %2045 = vmatpush1.bf16.msra.mxu0 %v1396
    %2046 = vmatprep.subr.bf16.mxu0 %v1393
    %2047 = vmatpush1.bf16.msra.mxu0 %v1392
    %2048 = vmatprep.subr.bf16.mxu0 %v1453
    %2049 = vmatpush2.bf16.msra.mxu0 %v1452
    %2050 = vmatprep.subr.bf16.mxu0 %v1449
    %2051 = vmatpush2.bf16.msra.mxu0 %v1448
    %2052 = vmatprep.subr.bf16.mxu0 %v1445
    %2053 = vmatpush2.bf16.msra.mxu0 %v1444
    %2054 = vmatprep.subr.bf16.mxu0 %v1441
    %2055 = vmatpush2.bf16.msra.mxu0 %v1440
    %2056 = vmatprep.subr.bf16.mxu0 %v1437
    %2057 = vmatpush2.bf16.msra.mxu0 %v1436
    %2058 = vmatprep.subr.bf16.mxu0 %v1433
    %2059 = vmatpush2.bf16.msra.mxu0 %v1432
    %2060 = vmatprep.subr.bf16.mxu0 %v1429
    %2061 = vmatpush2.bf16.msra.mxu0 %v1428
    %2062 = vmatprep.subr.bf16.mxu0 %v1425
    %2063 = vmatpush2.bf16.msra.mxu0 %v1424
    %2064 = vmatprep.mubr.bf16.mxu0 %v484
    %2065 = vmatmul.mubr.bf16.gmra.mxu0 %v480
    %v2066 = vpop.f32.mrf.mxu0
    %v2067 = vadd.f32 %v2024, %v2066
    %v2068 = vpop.f32.mrf.mxu0
    %v2069 = vadd.f32 %v2026, %v2068
    %v2070 = vpop.f32.mrf.mxu0
    %v2071 = vadd.f32 %v2028, %v2070
    %v2072 = vpop.f32.mrf.mxu0
    %v2073 = vadd.f32 %v2030, %v2072
    %2074 = vdwg.mxu0
    %2075 = vmatprep.subr.bf16.mxu0 %v1485
    %2076 = vmatpush1.bf16.msra.mxu0 %v1484
    %2077 = vmatprep.subr.bf16.mxu0 %v1481
    %2078 = vmatpush1.bf16.msra.mxu0 %v1480
    %2079 = vmatprep.subr.bf16.mxu0 %v1477
    %2080 = vmatpush1.bf16.msra.mxu0 %v1476
    %2081 = vmatprep.subr.bf16.mxu0 %v1473
    %2082 = vmatpush1.bf16.msra.mxu0 %v1472
    %2083 = vmatprep.subr.bf16.mxu0 %v1469
    %2084 = vmatpush1.bf16.msra.mxu0 %v1468
    %2085 = vmatprep.subr.bf16.mxu0 %v1465
    %2086 = vmatpush1.bf16.msra.mxu0 %v1464
    %2087 = vmatprep.subr.bf16.mxu0 %v1461
    %2088 = vmatpush1.bf16.msra.mxu0 %v1460
    %2089 = vmatprep.subr.bf16.mxu0 %v1457
    %2090 = vmatpush1.bf16.msra.mxu0 %v1456
    %2091 = vmatprep.subr.bf16.mxu0 %v1517
    %2092 = vmatpush2.bf16.msra.mxu0 %v1516
    %2093 = vmatprep.subr.bf16.mxu0 %v1513
    %2094 = vmatpush2.bf16.msra.mxu0 %v1512
    %2095 = vmatprep.subr.bf16.mxu0 %v1509
    %2096 = vmatpush2.bf16.msra.mxu0 %v1508
    %2097 = vmatprep.subr.bf16.mxu0 %v1505
    %2098 = vmatpush2.bf16.msra.mxu0 %v1504
    %2099 = vmatprep.subr.bf16.mxu0 %v1501
    %2100 = vmatpush2.bf16.msra.mxu0 %v1500
    %2101 = vmatprep.subr.bf16.mxu0 %v1497
    %2102 = vmatpush2.bf16.msra.mxu0 %v1496
    %2103 = vmatprep.subr.bf16.mxu0 %v1493
    %2104 = vmatpush2.bf16.msra.mxu0 %v1492
    %2105 = vmatprep.subr.bf16.mxu0 %v1489
    %2106 = vmatpush2.bf16.msra.mxu0 %v1488
    %2107 = vmatprep.mubr.bf16.mxu0 %v485
    %2108 = vmatmul.mubr.bf16.gmra.mxu0 %v481
    %v2109 = vpop.f32.mrf.mxu0
    %v2110 = vadd.f32 %v2067, %v2109
    %v2111 = vpop.f32.mrf.mxu0
    %v2112 = vadd.f32 %v2069, %v2111
    %v2113 = vpop.f32.mrf.mxu0
    %v2114 = vadd.f32 %v2071, %v2113
    %v2115 = vpop.f32.mrf.mxu0
    %v2116 = vadd.f32 %v2073, %v2115
    %2117 = vdwg.mxu0
    %v2118 = vmax.f32 %v1938, 0.0
    %v2119 = vmax.f32 %v1940, 0.0
    %v2120 = vmax.f32 %v2110, 0.0
    %v2121 = vmax.f32 %v2112, 0.0
    %v2122 = vmax.f32 %v1942, 0.0
    %v2123 = vmax.f32 %v1944, 0.0
    %v2124 = vmax.f32 %v2114, 0.0
    %v2125 = vmax.f32 %v2116, 0.0
    %v2126 = vpack.c.bf16 %v2122, %v2118
    %v2127 = vpack.c.bf16 %v2123, %v2119
    %v2128 = vpack.c.bf16 %v2124, %v2120
    %v2129 = vpack.c.bf16 %v2125, %v2121
    %v2130 = vld [vmem:[#allocation5] sm:$0xff]
    %v2131 = vld [vmem:[#allocation5 + $0x8] sm:$0xf]
    %v2132 = vld [vmem:[#allocation5 + $0xc] sm:$0xff]
    %v2133 = vld [vmem:[#allocation5 + $0x14] sm:$0xf]
    %v2134 = vld [vmem:[#allocation5 + $0x18] sm:$0xff]
    %v2135 = vld [vmem:[#allocation5 + $0x20] sm:$0xf]
    %v2136 = vld [vmem:[#allocation5 + $0x24] sm:$0xff]
    %v2137 = vld [vmem:[#allocation5 + $0x2c] sm:$0xf]
    %v2138 = vld [vmem:[#allocation5 + $0x30] sm:$0xff]
    %v2139 = vld [vmem:[#allocation5 + $0x38] sm:$0xf]
    %v2140 = vld [vmem:[#allocation5 + $0x3c] sm:$0xff]
    %v2141 = vld [vmem:[#allocation5 + $0x44] sm:$0xf]
    %v2142 = vld [vmem:[#allocation5 + $0x48] sm:$0xff]
    %v2143 = vld [vmem:[#allocation5 + $0x50] sm:$0xf]
    %v2144 = vld [vmem:[#allocation5 + $0x54] sm:$0xff]
    %v2145 = vld [vmem:[#allocation5 + $0x5c] sm:$0xf]
    %v2146 = vld [vmem:[#allocation5 + $0x60] sm:$0xff]
    %v2147 = vld [vmem:[#allocation5 + $0x68] sm:$0xf]
    %v2148 = vld [vmem:[#allocation5 + $0x6c] sm:$0xff]
    %v2149 = vld [vmem:[#allocation5 + $0x74] sm:$0xf]
    %v2150 = vld [vmem:[#allocation5 + $0x78] sm:$0xff]
    %v2151 = vld [vmem:[#allocation5 + $0x80] sm:$0xf]
    %v2152 = vld [vmem:[#allocation5 + $0x84] sm:$0xff]
    %v2153 = vld [vmem:[#allocation5 + $0x8c] sm:$0xf]
    %v2154 = vld [vmem:[#allocation5 + $0x90] sm:$0xff]
    %v2155 = vld [vmem:[#allocation5 + $0x98] sm:$0xf]
    %v2156 = vld [vmem:[#allocation5 + $0x9c] sm:$0xff]
    %v2157 = vld [vmem:[#allocation5 + $0xa4] sm:$0xf]
    %v2158 = vld [vmem:[#allocation5 + $0xa8] sm:$0xff]
    %v2159 = vld [vmem:[#allocation5 + $0xb0] sm:$0xf]
    %v2160 = vld [vmem:[#allocation5 + $0xb4] sm:$0xff]
    %v2161 = vld [vmem:[#allocation5 + $0xbc] sm:$0xf]
    %v2162 = vld [vmem:[#allocation5 + $0xc0] sm:$0xff]
    %v2163 = vld [vmem:[#allocation5 + $0xc8] sm:$0xf]
    %v2164 = vld [vmem:[#allocation5 + $0xcc] sm:$0xff]
    %v2165 = vld [vmem:[#allocation5 + $0xd4] sm:$0xf]
    %v2166 = vld [vmem:[#allocation5 + $0xd8] sm:$0xff]
    %v2167 = vld [vmem:[#allocation5 + $0xe0] sm:$0xf]
    %v2168 = vld [vmem:[#allocation5 + $0xe4] sm:$0xff]
    %v2169 = vld [vmem:[#allocation5 + $0xec] sm:$0xf]
    %v2170 = vld [vmem:[#allocation5 + $0xf0] sm:$0xff]
    %v2171 = vld [vmem:[#allocation5 + $0xf8] sm:$0xf]
    %v2172 = vld [vmem:[#allocation5 + $0xfc] sm:$0xff]
    %v2173 = vld [vmem:[#allocation5 + $0x104] sm:$0xf]
    %v2174 = vld [vmem:[#allocation5 + $0x108] sm:$0xff]
    %v2175 = vld [vmem:[#allocation5 + $0x110] sm:$0xf]
    %v2176 = vld [vmem:[#allocation5 + $0x114] sm:$0xff]
    %v2177 = vld [vmem:[#allocation5 + $0x11c] sm:$0xf]
    %v2178 = vld [vmem:[#allocation5 + $0x120] sm:$0xff]
    %v2179 = vld [vmem:[#allocation5 + $0x128] sm:$0xf]
    %v2180 = vld [vmem:[#allocation5 + $0x12c] sm:$0xff]
    %v2181 = vld [vmem:[#allocation5 + $0x134] sm:$0xf]
    %v2182 = vld [vmem:[#allocation5 + $0x138] sm:$0xff]
    %v2183 = vld [vmem:[#allocation5 + $0x140] sm:$0xf]
    %v2184 = vld [vmem:[#allocation5 + $0x144] sm:$0xff]
    %v2185 = vld [vmem:[#allocation5 + $0x14c] sm:$0xf]
    %v2186 = vld [vmem:[#allocation5 + $0x150] sm:$0xff]
    %v2187 = vld [vmem:[#allocation5 + $0x158] sm:$0xf]
    %v2188 = vld [vmem:[#allocation5 + $0x15c] sm:$0xff]
    %v2189 = vld [vmem:[#allocation5 + $0x164] sm:$0xf]
    %v2190 = vld [vmem:[#allocation5 + $0x168] sm:$0xff]
    %v2191 = vld [vmem:[#allocation5 + $0x170] sm:$0xf]
    %v2192 = vld [vmem:[#allocation5 + $0x174] sm:$0xff]
    %v2193 = vld [vmem:[#allocation5 + $0x17c] sm:$0xf]
    %v2194 = vld [vmem:[#allocation5 + $0x180] sm:$0xff]
    %v2195 = vld [vmem:[#allocation5 + $0x188] sm:$0xf]
    %v2196 = vld [vmem:[#allocation5 + $0x18c] sm:$0xff]
    %v2197 = vld [vmem:[#allocation5 + $0x194] sm:$0xf]
    %v2198 = vld [vmem:[#allocation5 + $0x198] sm:$0xff]
    %v2199 = vld [vmem:[#allocation5 + $0x1a0] sm:$0xf]
    %v2200 = vld [vmem:[#allocation5 + $0x1a4] sm:$0xff]
    %v2201 = vld [vmem:[#allocation5 + $0x1ac] sm:$0xf]
    %v2202 = vld [vmem:[#allocation5 + $0x1b0] sm:$0xff]
    %v2203 = vld [vmem:[#allocation5 + $0x1b8] sm:$0xf]
    %v2204 = vld [vmem:[#allocation5 + $0x1bc] sm:$0xff]
    %v2205 = vld [vmem:[#allocation5 + $0x1c4] sm:$0xf]
    %v2206 = vld [vmem:[#allocation5 + $0x1c8] sm:$0xff]
    %v2207 = vld [vmem:[#allocation5 + $0x1d0] sm:$0xf]
    %v2208 = vld [vmem:[#allocation5 + $0x1d4] sm:$0xff]
    %v2209 = vld [vmem:[#allocation5 + $0x1dc] sm:$0xf]
    %v2210 = vld [vmem:[#allocation5 + $0x1e0] sm:$0xff]
    %v2211 = vld [vmem:[#allocation5 + $0x1e8] sm:$0xf]
    %v2212 = vld [vmem:[#allocation5 + $0x1ec] sm:$0xff]
    %v2213 = vld [vmem:[#allocation5 + $0x1f4] sm:$0xf]
    %v2214 = vld [vmem:[#allocation5 + $0x1f8] sm:$0xff]
    %v2215 = vld [vmem:[#allocation5 + $0x200] sm:$0xf]
    %v2216 = vld [vmem:[#allocation5 + $0x204] sm:$0xff]
    %v2217 = vld [vmem:[#allocation5 + $0x20c] sm:$0xf]
    %v2218 = vld [vmem:[#allocation5 + $0x210] sm:$0xff]
    %v2219 = vld [vmem:[#allocation5 + $0x218] sm:$0xf]
    %v2220 = vld [vmem:[#allocation5 + $0x21c] sm:$0xff]
    %v2221 = vld [vmem:[#allocation5 + $0x224] sm:$0xf]
    %v2222 = vld [vmem:[#allocation5 + $0x228] sm:$0xff]
    %v2223 = vld [vmem:[#allocation5 + $0x230] sm:$0xf]
    %v2224 = vld [vmem:[#allocation5 + $0x234] sm:$0xff]
    %v2225 = vld [vmem:[#allocation5 + $0x23c] sm:$0xf]
    %v2226 = vld [vmem:[#allocation5 + $0x240] sm:$0xff]
    %v2227 = vld [vmem:[#allocation5 + $0x248] sm:$0xf]
    %v2228 = vld [vmem:[#allocation5 + $0x24c] sm:$0xff]
    %v2229 = vld [vmem:[#allocation5 + $0x254] sm:$0xf]
    %v2230 = vld [vmem:[#allocation5 + $0x258] sm:$0xff]
    %v2231 = vld [vmem:[#allocation5 + $0x260] sm:$0xf]
    %v2232 = vld [vmem:[#allocation5 + $0x264] sm:$0xff]
    %v2233 = vld [vmem:[#allocation5 + $0x26c] sm:$0xf]
    %v2234 = vld [vmem:[#allocation5 + $0x270] sm:$0xff]
    %v2235 = vld [vmem:[#allocation5 + $0x278] sm:$0xf]
    %v2236 = vld [vmem:[#allocation5 + $0x27c] sm:$0xff]
    %v2237 = vld [vmem:[#allocation5 + $0x284] sm:$0xf]
    %v2238 = vld [vmem:[#allocation5 + $0x288] sm:$0xff]
    %v2239 = vld [vmem:[#allocation5 + $0x290] sm:$0xf]
    %v2240 = vld [vmem:[#allocation5 + $0x294] sm:$0xff]
    %v2241 = vld [vmem:[#allocation5 + $0x29c] sm:$0xf]
    %v2242 = vld [vmem:[#allocation5 + $0x2a0] sm:$0xff]
    %v2243 = vld [vmem:[#allocation5 + $0x2a8] sm:$0xf]
    %v2244 = vld [vmem:[#allocation5 + $0x2ac] sm:$0xff]
    %v2245 = vld [vmem:[#allocation5 + $0x2b4] sm:$0xf]
    %v2246 = vld [vmem:[#allocation5 + $0x2b8] sm:$0xff]
    %v2247 = vld [vmem:[#allocation5 + $0x2c0] sm:$0xf]
    %v2248 = vld [vmem:[#allocation5 + $0x2c4] sm:$0xff]
    %v2249 = vld [vmem:[#allocation5 + $0x2cc] sm:$0xf]
    %v2250 = vld [vmem:[#allocation5 + $0x2d0] sm:$0xff]
    %v2251 = vld [vmem:[#allocation5 + $0x2d8] sm:$0xf]
    %v2252 = vld [vmem:[#allocation5 + $0x2dc] sm:$0xff]
    %v2253 = vld [vmem:[#allocation5 + $0x2e4] sm:$0xf]
    %v2254 = vld [vmem:[#allocation5 + $0x2e8] sm:$0xff]
    %v2255 = vld [vmem:[#allocation5 + $0x2f0] sm:$0xf]
    %v2256 = vld [vmem:[#allocation5 + $0x2f4] sm:$0xff]
    %v2257 = vld [vmem:[#allocation5 + $0x2fc] sm:$0xf]
    %v2258 = vld [vmem:[%s4] sm:$0x7]
    %v2260 = vlaneseq
    %v2261 = vshrl.u32 %v2260, 7
    %v2262 = vsub.s32 0, %v2261
    %v2263 = vrot.slane %v2258, %v2262
    %v2264 = vlaneseq
    %v2265 = vshrl.u32 %v2264, 7
    %v2266 = vsub.s32 1, %v2265
    %v2267 = vrot.slane %v2258, %v2266
    %v2268 = vlaneseq
    %v2269 = vshrl.u32 %v2268, 7
    %v2270 = vsub.s32 2, %v2269
    %v2271 = vrot.slane %v2258, %v2270
    %v2403 = vunpack.c.l.b16 %v2130
    %v2404 = vunpack.c.h.b16 %v2130
    %v2405 = vunpack.c.l.b16 %v2131
    %v2406 = vunpack.c.l.b16 %v2132
    %v2407 = vunpack.c.h.b16 %v2132
    %v2408 = vunpack.c.l.b16 %v2133
    %v2409 = vunpack.c.l.b16 %v2134
    %v2410 = vunpack.c.h.b16 %v2134
    %v2411 = vunpack.c.l.b16 %v2135
    %v2412 = vunpack.c.l.b16 %v2136
    %v2413 = vunpack.c.h.b16 %v2136
    %v2414 = vunpack.c.l.b16 %v2137
    %v2415 = vunpack.c.l.b16 %v2138
    %v2416 = vunpack.c.h.b16 %v2138
    %v2417 = vunpack.c.l.b16 %v2139
    %v2418 = vunpack.c.l.b16 %v2140
    %v2419 = vunpack.c.h.b16 %v2140
    %v2420 = vunpack.c.l.b16 %v2141
    %v2421 = vunpack.c.l.b16 %v2142
    %v2422 = vunpack.c.h.b16 %v2142
    %v2423 = vunpack.c.l.b16 %v2143
    %v2424 = vunpack.c.l.b16 %v2144
    %v2425 = vunpack.c.h.b16 %v2144
    %v2426 = vunpack.c.l.b16 %v2145
    %v2427 = vunpack.c.l.b16 %v2146
    %v2428 = vunpack.c.h.b16 %v2146
    %v2429 = vunpack.c.l.b16 %v2147
    %v2430 = vunpack.c.l.b16 %v2148
    %v2431 = vunpack.c.h.b16 %v2148
    %v2432 = vunpack.c.l.b16 %v2149
    %v2433 = vunpack.c.l.b16 %v2150
    %v2434 = vunpack.c.h.b16 %v2150
    %v2435 = vunpack.c.l.b16 %v2151
    %v2436 = vunpack.c.l.b16 %v2152
    %v2437 = vunpack.c.h.b16 %v2152
    %v2438 = vunpack.c.l.b16 %v2153
    %v2439 = vunpack.c.l.b16 %v2154
    %v2440 = vunpack.c.h.b16 %v2154
    %v2441 = vunpack.c.l.b16 %v2155
    %v2442 = vunpack.c.l.b16 %v2156
    %v2443 = vunpack.c.h.b16 %v2156
    %v2444 = vunpack.c.l.b16 %v2157
    %v2445 = vunpack.c.l.b16 %v2158
    %v2446 = vunpack.c.h.b16 %v2158
    %v2447 = vunpack.c.l.b16 %v2159
    %v2448 = vunpack.c.l.b16 %v2160
    %v2449 = vunpack.c.h.b16 %v2160
    %v2450 = vunpack.c.l.b16 %v2161
    %v2451 = vunpack.c.l.b16 %v2162
    %v2452 = vunpack.c.h.b16 %v2162
    %v2453 = vunpack.c.l.b16 %v2163
    %v2454 = vunpack.c.l.b16 %v2164
    %v2455 = vunpack.c.h.b16 %v2164
    %v2456 = vunpack.c.l.b16 %v2165
    %v2457 = vunpack.c.l.b16 %v2166
    %v2458 = vunpack.c.h.b16 %v2166
    %v2459 = vunpack.c.l.b16 %v2167
    %v2460 = vunpack.c.l.b16 %v2168
    %v2461 = vunpack.c.h.b16 %v2168
    %v2462 = vunpack.c.l.b16 %v2169
    %v2463 = vunpack.c.l.b16 %v2170
    %v2464 = vunpack.c.h.b16 %v2170
    %v2465 = vunpack.c.l.b16 %v2171
    %v2466 = vunpack.c.l.b16 %v2172
    %v2467 = vunpack.c.h.b16 %v2172
    %v2468 = vunpack.c.l.b16 %v2173
    %v2469 = vunpack.c.l.b16 %v2174
    %v2470 = vunpack.c.h.b16 %v2174
    %v2471 = vunpack.c.l.b16 %v2175
    %v2472 = vunpack.c.l.b16 %v2176
    %v2473 = vunpack.c.h.b16 %v2176
    %v2474 = vunpack.c.l.b16 %v2177
    %v2475 = vunpack.c.l.b16 %v2178
    %v2476 = vunpack.c.h.b16 %v2178
    %v2477 = vunpack.c.l.b16 %v2179
    %v2478 = vunpack.c.l.b16 %v2180
    %v2479 = vunpack.c.h.b16 %v2180
    %v2480 = vunpack.c.l.b16 %v2181
    %v2481 = vunpack.c.l.b16 %v2182
    %v2482 = vunpack.c.h.b16 %v2182
    %v2483 = vunpack.c.l.b16 %v2183
    %v2484 = vunpack.c.l.b16 %v2184
    %v2485 = vunpack.c.h.b16 %v2184
    %v2486 = vunpack.c.l.b16 %v2185
    %v2487 = vunpack.c.l.b16 %v2186
    %v2488 = vunpack.c.h.b16 %v2186
    %v2489 = vunpack.c.l.b16 %v2187
    %v2490 = vunpack.c.l.b16 %v2188
    %v2491 = vunpack.c.h.b16 %v2188
    %v2492 = vunpack.c.l.b16 %v2189
    %v2493 = vunpack.c.l.b16 %v2190
    %v2494 = vunpack.c.h.b16 %v2190
    %v2495 = vunpack.c.l.b16 %v2191
    %v2496 = vunpack.c.l.b16 %v2192
    %v2497 = vunpack.c.h.b16 %v2192
    %v2498 = vunpack.c.l.b16 %v2193
    %v2499 = vunpack.c.l.b16 %v2194
    %v2500 = vunpack.c.h.b16 %v2194
    %v2501 = vunpack.c.l.b16 %v2195
    %v2502 = vunpack.c.l.b16 %v2196
    %v2503 = vunpack.c.h.b16 %v2196
    %v2504 = vunpack.c.l.b16 %v2197
    %v2505 = vunpack.c.l.b16 %v2198
    %v2506 = vunpack.c.h.b16 %v2198
    %v2507 = vunpack.c.l.b16 %v2199
    %v2508 = vunpack.c.l.b16 %v2200
    %v2509 = vunpack.c.h.b16 %v2200
    %v2510 = vunpack.c.l.b16 %v2201
    %v2511 = vunpack.c.l.b16 %v2202
    %v2512 = vunpack.c.h.b16 %v2202
    %v2513 = vunpack.c.l.b16 %v2203
    %v2514 = vunpack.c.l.b16 %v2204
    %v2515 = vunpack.c.h.b16 %v2204
    %v2516 = vunpack.c.l.b16 %v2205
    %v2517 = vunpack.c.l.b16 %v2206
    %v2518 = vunpack.c.h.b16 %v2206
    %v2519 = vunpack.c.l.b16 %v2207
    %v2520 = vunpack.c.l.b16 %v2208
    %v2521 = vunpack.c.h.b16 %v2208
    %v2522 = vunpack.c.l.b16 %v2209
    %v2523 = vunpack.c.l.b16 %v2210
    %v2524 = vunpack.c.h.b16 %v2210
    %v2525 = vunpack.c.l.b16 %v2211
    %v2526 = vunpack.c.l.b16 %v2212
    %v2527 = vunpack.c.h.b16 %v2212
    %v2528 = vunpack.c.l.b16 %v2213
    %v2529 = vunpack.c.l.b16 %v2214
    %v2530 = vunpack.c.h.b16 %v2214
    %v2531 = vunpack.c.l.b16 %v2215
    %v2532 = vunpack.c.l.b16 %v2216
    %v2533 = vunpack.c.h.b16 %v2216
    %v2534 = vunpack.c.l.b16 %v2217
    %v2535 = vunpack.c.l.b16 %v2218
    %v2536 = vunpack.c.h.b16 %v2218
    %v2537 = vunpack.c.l.b16 %v2219
    %v2538 = vunpack.c.l.b16 %v2220
    %v2539 = vunpack.c.h.b16 %v2220
    %v2540 = vunpack.c.l.b16 %v2221
    %v2541 = vunpack.c.l.b16 %v2222
    %v2542 = vunpack.c.h.b16 %v2222
    %v2543 = vunpack.c.l.b16 %v2223
    %v2544 = vunpack.c.l.b16 %v2224
    %v2545 = vunpack.c.h.b16 %v2224
    %v2546 = vunpack.c.l.b16 %v2225
    %v2547 = vunpack.c.l.b16 %v2226
    %v2548 = vunpack.c.h.b16 %v2226
    %v2549 = vunpack.c.l.b16 %v2227
    %v2550 = vunpack.c.l.b16 %v2228
    %v2551 = vunpack.c.h.b16 %v2228
    %v2552 = vunpack.c.l.b16 %v2229
    %v2553 = vunpack.c.l.b16 %v2230
    %v2554 = vunpack.c.h.b16 %v2230
    %v2555 = vunpack.c.l.b16 %v2231
    %v2556 = vunpack.c.l.b16 %v2232
    %v2557 = vunpack.c.h.b16 %v2232
    %v2558 = vunpack.c.l.b16 %v2233
    %v2559 = vunpack.c.l.b16 %v2234
    %v2560 = vunpack.c.h.b16 %v2234
    %v2561 = vunpack.c.l.b16 %v2235
    %v2562 = vunpack.c.l.b16 %v2236
    %v2563 = vunpack.c.h.b16 %v2236
    %v2564 = vunpack.c.l.b16 %v2237
    %v2565 = vunpack.c.l.b16 %v2238
    %v2566 = vunpack.c.h.b16 %v2238
    %v2567 = vunpack.c.l.b16 %v2239
    %v2568 = vunpack.c.l.b16 %v2240
    %v2569 = vunpack.c.h.b16 %v2240
    %v2570 = vunpack.c.l.b16 %v2241
    %v2571 = vunpack.c.l.b16 %v2242
    %v2572 = vunpack.c.h.b16 %v2242
    %v2573 = vunpack.c.l.b16 %v2243
    %v2574 = vunpack.c.l.b16 %v2244
    %v2575 = vunpack.c.h.b16 %v2244
    %v2576 = vunpack.c.l.b16 %v2245
    %v2577 = vunpack.c.l.b16 %v2246
    %v2578 = vunpack.c.h.b16 %v2246
    %v2579 = vunpack.c.l.b16 %v2247
    %v2580 = vunpack.c.l.b16 %v2248
    %v2581 = vunpack.c.h.b16 %v2248
    %v2582 = vunpack.c.l.b16 %v2249
    %v2583 = vunpack.c.l.b16 %v2250
    %v2584 = vunpack.c.h.b16 %v2250
    %v2585 = vunpack.c.l.b16 %v2251
    %v2586 = vunpack.c.l.b16 %v2252
    %v2587 = vunpack.c.h.b16 %v2252
    %v2588 = vunpack.c.l.b16 %v2253
    %v2589 = vunpack.c.l.b16 %v2254
    %v2590 = vunpack.c.h.b16 %v2254
    %v2591 = vunpack.c.l.b16 %v2255
    %v2592 = vunpack.c.l.b16 %v2256
    %v2593 = vunpack.c.h.b16 %v2256
    %v2594 = vunpack.c.l.b16 %v2257
    %v2595 = vpack.c.b16 %v2406, %v2403
    %v2596 = vpack.c.b16 %v2407, %v2404
    %v2597 = vpack.c.b16 %v2408, %v2405
    %v2598 = vpack.c.b16 %v2412, %v2409
    %v2599 = vpack.c.b16 %v2413, %v2410
    %v2600 = vpack.c.b16 %v2414, %v2411
    %v2601 = vpack.c.b16 %v2418, %v2415
    %v2602 = vpack.c.b16 %v2419, %v2416
    %v2603 = vpack.c.b16 %v2420, %v2417
    %v2604 = vpack.c.b16 %v2424, %v2421
    %v2605 = vpack.c.b16 %v2425, %v2422
    %v2606 = vpack.c.b16 %v2426, %v2423
    %v2607 = vpack.c.b16 %v2430, %v2427
    %v2608 = vpack.c.b16 %v2431, %v2428
    %v2609 = vpack.c.b16 %v2432, %v2429
    %v2610 = vpack.c.b16 %v2436, %v2433
    %v2611 = vpack.c.b16 %v2437, %v2434
    %v2612 = vpack.c.b16 %v2438, %v2435
    %v2613 = vpack.c.b16 %v2442, %v2439
    %v2614 = vpack.c.b16 %v2443, %v2440
    %v2615 = vpack.c.b16 %v2444, %v2441
    %v2616 = vpack.c.b16 %v2448, %v2445
    %v2617 = vpack.c.b16 %v2449, %v2446
    %v2618 = vpack.c.b16 %v2450, %v2447
    %v2619 = vpack.c.b16 %v2454, %v2451
    %v2620 = vpack.c.b16 %v2455, %v2452
    %v2621 = vpack.c.b16 %v2456, %v2453
    %v2622 = vpack.c.b16 %v2460, %v2457
    %v2623 = vpack.c.b16 %v2461, %v2458
    %v2624 = vpack.c.b16 %v2462, %v2459
    %v2625 = vpack.c.b16 %v2466, %v2463
    %v2626 = vpack.c.b16 %v2467, %v2464
    %v2627 = vpack.c.b16 %v2468, %v2465
    %v2628 = vpack.c.b16 %v2472, %v2469
    %v2629 = vpack.c.b16 %v2473, %v2470
    %v2630 = vpack.c.b16 %v2474, %v2471
    %v2631 = vpack.c.b16 %v2478, %v2475
    %v2632 = vpack.c.b16 %v2479, %v2476
    %v2633 = vpack.c.b16 %v2480, %v2477
    %v2634 = vpack.c.b16 %v2484, %v2481
    %v2635 = vpack.c.b16 %v2485, %v2482
    %v2636 = vpack.c.b16 %v2486, %v2483
    %v2637 = vpack.c.b16 %v2490, %v2487
    %v2638 = vpack.c.b16 %v2491, %v2488
    %v2639 = vpack.c.b16 %v2492, %v2489
    %v2640 = vpack.c.b16 %v2496, %v2493
    %v2641 = vpack.c.b16 %v2497, %v2494
    %v2642 = vpack.c.b16 %v2498, %v2495
    %v2643 = vpack.c.b16 %v2502, %v2499
    %v2644 = vpack.c.b16 %v2503, %v2500
    %v2645 = vpack.c.b16 %v2504, %v2501
    %v2646 = vpack.c.b16 %v2508, %v2505
    %v2647 = vpack.c.b16 %v2509, %v2506
    %v2648 = vpack.c.b16 %v2510, %v2507
    %v2649 = vpack.c.b16 %v2514, %v2511
    %v2650 = vpack.c.b16 %v2515, %v2512
    %v2651 = vpack.c.b16 %v2516, %v2513
    %v2652 = vpack.c.b16 %v2520, %v2517
    %v2653 = vpack.c.b16 %v2521, %v2518
    %v2654 = vpack.c.b16 %v2522, %v2519
    %v2655 = vpack.c.b16 %v2526, %v2523
    %v2656 = vpack.c.b16 %v2527, %v2524
    %v2657 = vpack.c.b16 %v2528, %v2525
    %v2658 = vpack.c.b16 %v2532, %v2529
    %v2659 = vpack.c.b16 %v2533, %v2530
    %v2660 = vpack.c.b16 %v2534, %v2531
    %v2661 = vpack.c.b16 %v2538, %v2535
    %v2662 = vpack.c.b16 %v2539, %v2536
    %v2663 = vpack.c.b16 %v2540, %v2537
    %v2664 = vpack.c.b16 %v2544, %v2541
    %v2665 = vpack.c.b16 %v2545, %v2542
    %v2666 = vpack.c.b16 %v2546, %v2543
    %v2667 = vpack.c.b16 %v2550, %v2547
    %v2668 = vpack.c.b16 %v2551, %v2548
    %v2669 = vpack.c.b16 %v2552, %v2549
    %v2670 = vpack.c.b16 %v2556, %v2553
    %v2671 = vpack.c.b16 %v2557, %v2554
    %v2672 = vpack.c.b16 %v2558, %v2555
    %v2673 = vpack.c.b16 %v2562, %v2559
    %v2674 = vpack.c.b16 %v2563, %v2560
    %v2675 = vpack.c.b16 %v2564, %v2561
    %v2676 = vpack.c.b16 %v2568, %v2565
    %v2677 = vpack.c.b16 %v2569, %v2566
    %v2678 = vpack.c.b16 %v2570, %v2567
    %v2679 = vpack.c.b16 %v2574, %v2571
    %v2680 = vpack.c.b16 %v2575, %v2572
    %v2681 = vpack.c.b16 %v2576, %v2573
    %v2682 = vpack.c.b16 %v2580, %v2577
    %v2683 = vpack.c.b16 %v2581, %v2578
    %v2684 = vpack.c.b16 %v2582, %v2579
    %v2685 = vpack.c.b16 %v2586, %v2583
    %v2686 = vpack.c.b16 %v2587, %v2584
    %v2687 = vpack.c.b16 %v2588, %v2585
    %v2688 = vpack.c.b16 %v2592, %v2589
    %v2689 = vpack.c.b16 %v2593, %v2590
    %v2690 = vpack.c.b16 %v2594, %v2591
    %2787 = vmatprep.subr.bf16.mxu0 %v2617
    %2788 = vmatpush1.bf16.msra.mxu0 %v2616
    %2789 = vmatprep.subr.bf16.mxu0 %v2614
    %2790 = vmatpush1.bf16.msra.mxu0 %v2613
    %2791 = vmatprep.subr.bf16.mxu0 %v2611
    %2792 = vmatpush1.bf16.msra.mxu0 %v2610
    %2793 = vmatprep.subr.bf16.mxu0 %v2608
    %2794 = vmatpush1.bf16.msra.mxu0 %v2607
    %2795 = vmatprep.subr.bf16.mxu0 %v2605
    %2796 = vmatpush1.bf16.msra.mxu0 %v2604
    %2797 = vmatprep.subr.bf16.mxu0 %v2602
    %2798 = vmatpush1.bf16.msra.mxu0 %v2601
    %2799 = vmatprep.subr.bf16.mxu0 %v2599
    %2800 = vmatpush1.bf16.msra.mxu0 %v2598
    %2801 = vmatprep.subr.bf16.mxu0 %v2596
    %2802 = vmatpush1.bf16.msra.mxu0 %v2595
    %2803 = vmatprep.subr.bf16.mxu0 %v2641
    %2804 = vmatpush2.bf16.msra.mxu0 %v2640
    %2805 = vmatprep.subr.bf16.mxu0 %v2638
    %2806 = vmatpush2.bf16.msra.mxu0 %v2637
    %2807 = vmatprep.subr.bf16.mxu0 %v2635
    %2808 = vmatpush2.bf16.msra.mxu0 %v2634
    %2809 = vmatprep.subr.bf16.mxu0 %v2632
    %2810 = vmatpush2.bf16.msra.mxu0 %v2631
    %2811 = vmatprep.subr.bf16.mxu0 %v2629
    %2812 = vmatpush2.bf16.msra.mxu0 %v2628
    %2813 = vmatprep.subr.bf16.mxu0 %v2626
    %2814 = vmatpush2.bf16.msra.mxu0 %v2625
    %2815 = vmatprep.subr.bf16.mxu0 %v2623
    %2816 = vmatpush2.bf16.msra.mxu0 %v2622
    %2817 = vmatprep.subr.bf16.mxu0 %v2620
    %2818 = vmatpush2.bf16.msra.mxu0 %v2619
    %2819 = vmatprep.mubr.bf16.mxu0 %v2127
    %2820 = vmatmul.mubr.bf16.gmra.mxu0 %v2126
    %v2821 = vpop.f32.mrf.mxu0
    %v2822 = vadd.f32 %v2263, %v2821
    %v2823 = vpop.f32.mrf.mxu0
    %v2824 = vadd.f32 %v2267, %v2823
    %v2825 = vpop.f32.mrf.mxu0
    %v2826 = vadd.f32 %v2263, %v2825
    %v2827 = vpop.f32.mrf.mxu0
    %v2828 = vadd.f32 %v2267, %v2827
    %2829 = vdwg.mxu0
    %2830 = vmatprep.subr.bf16.mxu0 %v2665
    %2831 = vmatpush1.bf16.msra.mxu0 %v2664
    %2832 = vmatprep.subr.bf16.mxu0 %v2662
    %2833 = vmatpush1.bf16.msra.mxu0 %v2661
    %2834 = vmatprep.subr.bf16.mxu0 %v2659
    %2835 = vmatpush1.bf16.msra.mxu0 %v2658
    %2836 = vmatprep.subr.bf16.mxu0 %v2656
    %2837 = vmatpush1.bf16.msra.mxu0 %v2655
    %2838 = vmatprep.subr.bf16.mxu0 %v2653
    %2839 = vmatpush1.bf16.msra.mxu0 %v2652
    %2840 = vmatprep.subr.bf16.mxu0 %v2650
    %2841 = vmatpush1.bf16.msra.mxu0 %v2649
    %2842 = vmatprep.subr.bf16.mxu0 %v2647
    %2843 = vmatpush1.bf16.msra.mxu0 %v2646
    %2844 = vmatprep.subr.bf16.mxu0 %v2644
    %2845 = vmatpush1.bf16.msra.mxu0 %v2643
    %2846 = vmatprep.subr.bf16.mxu0 %v2689
    %2847 = vmatpush2.bf16.msra.mxu0 %v2688
    %2848 = vmatprep.subr.bf16.mxu0 %v2686
    %2849 = vmatpush2.bf16.msra.mxu0 %v2685
    %2850 = vmatprep.subr.bf16.mxu0 %v2683
    %2851 = vmatpush2.bf16.msra.mxu0 %v2682
    %2852 = vmatprep.subr.bf16.mxu0 %v2680
    %2853 = vmatpush2.bf16.msra.mxu0 %v2679
    %2854 = vmatprep.subr.bf16.mxu0 %v2677
    %2855 = vmatpush2.bf16.msra.mxu0 %v2676
    %2856 = vmatprep.subr.bf16.mxu0 %v2674
    %2857 = vmatpush2.bf16.msra.mxu0 %v2673
    %2858 = vmatprep.subr.bf16.mxu0 %v2671
    %2859 = vmatpush2.bf16.msra.mxu0 %v2670
    %2860 = vmatprep.subr.bf16.mxu0 %v2668
    %2861 = vmatpush2.bf16.msra.mxu0 %v2667
    %2862 = vmatprep.mubr.bf16.mxu0 %v2129
    %2863 = vmatmul.mubr.bf16.gmra.mxu0 %v2128
    %v2864 = vpop.f32.mrf.mxu0
    %v2865 = vadd.f32 %v2822, %v2864
    %v2866 = vpop.f32.mrf.mxu0
    %v2867 = vadd.f32 %v2824, %v2866
    %v2868 = vpop.f32.mrf.mxu0
    %v2869 = vadd.f32 %v2826, %v2868
    %v2870 = vpop.f32.mrf.mxu0
    %v2871 = vadd.f32 %v2828, %v2870
    %2872 = vdwg.mxu0
    %2873 = vmatprep.subr.bf16.mxu0 0
    %2874 = vmatpush1.bf16.msra.mxu0 %v2618
    %2875 = vmatprep.subr.bf16.mxu0 0
    %2876 = vmatpush1.bf16.msra.mxu0 %v2615
    %2877 = vmatprep.subr.bf16.mxu0 0
    %2878 = vmatpush1.bf16.msra.mxu0 %v2612
    %2879 = vmatprep.subr.bf16.mxu0 0
    %2880 = vmatpush1.bf16.msra.mxu0 %v2609
    %2881 = vmatprep.subr.bf16.mxu0 0
    %2882 = vmatpush1.bf16.msra.mxu0 %v2606
    %2883 = vmatprep.subr.bf16.mxu0 0
    %2884 = vmatpush1.bf16.msra.mxu0 %v2603
    %2885 = vmatprep.subr.bf16.mxu0 0
    %2886 = vmatpush1.bf16.msra.mxu0 %v2600
    %2887 = vmatprep.subr.bf16.mxu0 0
    %2888 = vmatpush1.bf16.msra.mxu0 %v2597
    %2889 = vmatprep.subr.bf16.mxu0 0
    %2890 = vmatpush2.bf16.msra.mxu0 %v2642
    %2891 = vmatprep.subr.bf16.mxu0 0
    %2892 = vmatpush2.bf16.msra.mxu0 %v2639
    %2893 = vmatprep.subr.bf16.mxu0 0
    %2894 = vmatpush2.bf16.msra.mxu0 %v2636
    %2895 = vmatprep.subr.bf16.mxu0 0
    %2896 = vmatpush2.bf16.msra.mxu0 %v2633
    %2897 = vmatprep.subr.bf16.mxu0 0
    %2898 = vmatpush2.bf16.msra.mxu0 %v2630
    %2899 = vmatprep.subr.bf16.mxu0 0
    %2900 = vmatpush2.bf16.msra.mxu0 %v2627
    %2901 = vmatprep.subr.bf16.mxu0 0
    %2902 = vmatpush2.bf16.msra.mxu0 %v2624
    %2903 = vmatprep.subr.bf16.mxu0 0
    %2904 = vmatpush2.bf16.msra.mxu0 %v2621
    %2905 = vmatprep.mubr.bf16.mxu0 %v2127
    %2906 = vmatmul.mubr.bf16.gmra.mxu0 %v2126
    %v2907 = vpop.f32.mrf.mxu0
    %v2908 = vadd.f32 %v2271, %v2907
    %v2909 = vpop.f32.mrf.mxu0
    %v2910 = vpop.f32.mrf.mxu0
    %v2911 = vadd.f32 %v2271, %v2910
    %v2912 = vpop.f32.mrf.mxu0
    %2913 = vdwg.mxu0
    %2914 = vmatprep.subr.bf16.mxu0 0
    %2915 = vmatpush1.bf16.msra.mxu0 %v2666
    %2916 = vmatprep.subr.bf16.mxu0 0
    %2917 = vmatpush1.bf16.msra.mxu0 %v2663
    %2918 = vmatprep.subr.bf16.mxu0 0
    %2919 = vmatpush1.bf16.msra.mxu0 %v2660
    %2920 = vmatprep.subr.bf16.mxu0 0
    %2921 = vmatpush1.bf16.msra.mxu0 %v2657
    %2922 = vmatprep.subr.bf16.mxu0 0
    %2923 = vmatpush1.bf16.msra.mxu0 %v2654
    %2924 = vmatprep.subr.bf16.mxu0 0
    %2925 = vmatpush1.bf16.msra.mxu0 %v2651
    %2926 = vmatprep.subr.bf16.mxu0 0
    %2927 = vmatpush1.bf16.msra.mxu0 %v2648
    %2928 = vmatprep.subr.bf16.mxu0 0
    %2929 = vmatpush1.bf16.msra.mxu0 %v2645
    %2930 = vmatprep.subr.bf16.mxu0 0
    %2931 = vmatpush2.bf16.msra.mxu0 %v2690
    %2932 = vmatprep.subr.bf16.mxu0 0
    %2933 = vmatpush2.bf16.msra.mxu0 %v2687
    %2934 = vmatprep.subr.bf16.mxu0 0
    %2935 = vmatpush2.bf16.msra.mxu0 %v2684
    %2936 = vmatprep.subr.bf16.mxu0 0
    %2937 = vmatpush2.bf16.msra.mxu0 %v2681
    %2938 = vmatprep.subr.bf16.mxu0 0
    %2939 = vmatpush2.bf16.msra.mxu0 %v2678
    %2940 = vmatprep.subr.bf16.mxu0 0
    %2941 = vmatpush2.bf16.msra.mxu0 %v2675
    %2942 = vmatprep.subr.bf16.mxu0 0
    %2943 = vmatpush2.bf16.msra.mxu0 %v2672
    %2944 = vmatprep.subr.bf16.mxu0 0
    %2945 = vmatpush2.bf16.msra.mxu0 %v2669
    %2946 = vmatprep.mubr.bf16.mxu0 %v2129
    %2947 = vmatmul.mubr.bf16.gmra.mxu0 %v2128
    %v2948 = vpop.f32.mrf.mxu0
    %v2949 = vadd.f32 %v2908, %v2948
    %v2950 = vpop.f32.mrf.mxu0
    %v2951 = vpop.f32.mrf.mxu0
    %v2952 = vadd.f32 %v2911, %v2951
    %v2953 = vpop.f32.mrf.mxu0
    %2954 = vdwg.mxu0
    %v2955 = vmax.f32 %v2865, 0.0
    %v2956 = vmax.f32 %v2867, 0.0
    %v2957 = vmax.f32 %v2949, 0.0
    %v2958 = vmax.f32 %v2869, 0.0
    %v2959 = vmax.f32 %v2871, 0.0
    %v2960 = vmax.f32 %v2952, 0.0
    %v2961 = vpack.c.bf16 %v2958, %v2955
    %v2962 = vpack.c.bf16 %v2959, %v2956
    %v2963 = vpack.c.bf16 %v2960, %v2957
    %v2964 = vld [vmem:[%s5] sm:$0xf]
    %v2965 = vld [vmem:[%s5 + $0x4] sm:$0xf]
    %v2966 = vld [vmem:[%s5 + $0x8] sm:$0xf]
    %v2967 = vld [vmem:[%s5 + $0xc] sm:$0xf]
    %v2968 = vld [vmem:[%s5 + $0x10] sm:$0xf]
    %v2969 = vld [vmem:[%s5 + $0x14] sm:$0xf]
    %v2970 = vld [vmem:[%s5 + $0x18] sm:$0xf]
    %v2971 = vld [vmem:[%s5 + $0x1c] sm:$0xf]
    %v2972 = vld [vmem:[%s5 + $0x20] sm:$0xf]
    %v2973 = vld [vmem:[%s5 + $0x24] sm:$0xf]
    %v2974 = vld [vmem:[%s5 + $0x28] sm:$0xf]
    %v2975 = vld [vmem:[%s5 + $0x2c] sm:$0xf]
    %v2976 = vld [vmem:[%s5 + $0x30] sm:$0xf]
    %v2977 = vld [vmem:[%s5 + $0x34] sm:$0xf]
    %v2978 = vld [vmem:[%s5 + $0x38] sm:$0xf]
    %v2979 = vld [vmem:[%s5 + $0x3c] sm:$0xf]
    %v2980 = vld [vmem:[%s5 + $0x40] sm:$0xf]
    %v2981 = vld [vmem:[%s5 + $0x44] sm:$0xf]
    %v2982 = vld [vmem:[%s5 + $0x48] sm:$0xf]
    %v2983 = vld [vmem:[%s5 + $0x4c] sm:$0xf]
    %v2984 = vld [vmem:[%s5 + $0x50] sm:$0xf]
    %v2985 = vld [vmem:[%s5 + $0x54] sm:$0xf]
    %v2986 = vld [vmem:[%s5 + $0x58] sm:$0xf]
    %v2987 = vld [vmem:[%s5 + $0x5c] sm:$0xf]
    %v2988 = vld [vmem:[%s5 + $0x60] sm:$0xf]
    %v2989 = vld [vmem:[%s5 + $0x64] sm:$0xf]
    %v2990 = vld [vmem:[%s5 + $0x68] sm:$0xf]
    %v2991 = vld [vmem:[%s5 + $0x6c] sm:$0xf]
    %v2992 = vld [vmem:[%s5 + $0x70] sm:$0xf]
    %v2993 = vld [vmem:[%s5 + $0x74] sm:$0xf]
    %v2994 = vld [vmem:[%s5 + $0x78] sm:$0xf]
    %v2995 = vld [vmem:[%s5 + $0x7c] sm:$0xf]
    %v2996 = vld [vmem:[%s5 + $0x80] sm:$0xf]
    %v2997 = vld [vmem:[%s5 + $0x84] sm:$0xf]
    %v2998 = vld [vmem:[%s5 + $0x88] sm:$0xf]
    %v2999 = vld [vmem:[%s5 + $0x8c] sm:$0xf]
    %v3000 = vld [vmem:[%s5 + $0x90] sm:$0xf]
    %v3001 = vld [vmem:[%s5 + $0x94] sm:$0xf]
    %v3002 = vld [vmem:[%s5 + $0x98] sm:$0xf]
    %v3003 = vld [vmem:[%s5 + $0x9c] sm:$0xf]
    %v3004 = vld [vmem:[%s5 + $0xa0] sm:$0xf]
    %v3005 = vld [vmem:[%s5 + $0xa4] sm:$0xf]
    %v3006 = vld [vmem:[%s5 + $0xa8] sm:$0xf]
    %v3007 = vld [vmem:[%s5 + $0xac] sm:$0xf]
    %v3008 = vld [vmem:[%s5 + $0xb0] sm:$0xf]
    %v3009 = vld [vmem:[%s5 + $0xb4] sm:$0xf]
    %v3010 = vld [vmem:[%s5 + $0xb8] sm:$0xf]
    %v3011 = vld [vmem:[%s5 + $0xbc] sm:$0xf]
    %v3012 = vld [vmem:[%s6] sm:$0x1]
    %v3014 = vlaneseq
    %v3015 = vshrl.u32 %v3014, 7
    %v3016 = vsub.s32 0, %v3015
    %v3017 = vrot.slane %v3012, %v3016
    %v3067 = vunpack.c.l.b16 %v2964
    %v3068 = vunpack.c.l.b16 %v2965
    %v3069 = vunpack.c.l.b16 %v2966
    %v3070 = vunpack.c.l.b16 %v2967
    %v3071 = vunpack.c.l.b16 %v2968
    %v3072 = vunpack.c.l.b16 %v2969
    %v3073 = vunpack.c.l.b16 %v2970
    %v3074 = vunpack.c.l.b16 %v2971
    %v3075 = vunpack.c.l.b16 %v2972
    %v3076 = vunpack.c.l.b16 %v2973
    %v3077 = vunpack.c.l.b16 %v2974
    %v3078 = vunpack.c.l.b16 %v2975
    %v3079 = vunpack.c.l.b16 %v2976
    %v3080 = vunpack.c.l.b16 %v2977
    %v3081 = vunpack.c.l.b16 %v2978
    %v3082 = vunpack.c.l.b16 %v2979
    %v3083 = vunpack.c.l.b16 %v2980
    %v3084 = vunpack.c.l.b16 %v2981
    %v3085 = vunpack.c.l.b16 %v2982
    %v3086 = vunpack.c.l.b16 %v2983
    %v3087 = vunpack.c.l.b16 %v2984
    %v3088 = vunpack.c.l.b16 %v2985
    %v3089 = vunpack.c.l.b16 %v2986
    %v3090 = vunpack.c.l.b16 %v2987
    %v3091 = vunpack.c.l.b16 %v2988
    %v3092 = vunpack.c.l.b16 %v2989
    %v3093 = vunpack.c.l.b16 %v2990
    %v3094 = vunpack.c.l.b16 %v2991
    %v3095 = vunpack.c.l.b16 %v2992
    %v3096 = vunpack.c.l.b16 %v2993
    %v3097 = vunpack.c.l.b16 %v2994
    %v3098 = vunpack.c.l.b16 %v2995
    %v3099 = vunpack.c.l.b16 %v2996
    %v3100 = vunpack.c.l.b16 %v2997
    %v3101 = vunpack.c.l.b16 %v2998
    %v3102 = vunpack.c.l.b16 %v2999
    %v3103 = vunpack.c.l.b16 %v3000
    %v3104 = vunpack.c.l.b16 %v3001
    %v3105 = vunpack.c.l.b16 %v3002
    %v3106 = vunpack.c.l.b16 %v3003
    %v3107 = vunpack.c.l.b16 %v3004
    %v3108 = vunpack.c.l.b16 %v3005
    %v3109 = vunpack.c.l.b16 %v3006
    %v3110 = vunpack.c.l.b16 %v3007
    %v3111 = vunpack.c.l.b16 %v3008
    %v3112 = vunpack.c.l.b16 %v3009
    %v3113 = vunpack.c.l.b16 %v3010
    %v3114 = vunpack.c.l.b16 %v3011
    %v3115 = vpack.c.b16 %v3068, %v3067
    %v3116 = vpack.c.b16 %v3070, %v3069
    %v3117 = vpack.c.b16 %v3072, %v3071
    %v3118 = vpack.c.b16 %v3074, %v3073
    %v3119 = vpack.c.b16 %v3076, %v3075
    %v3120 = vpack.c.b16 %v3078, %v3077
    %v3121 = vpack.c.b16 %v3080, %v3079
    %v3122 = vpack.c.b16 %v3082, %v3081
    %v3123 = vpack.c.b16 %v3084, %v3083
    %v3124 = vpack.c.b16 %v3086, %v3085
    %v3125 = vpack.c.b16 %v3088, %v3087
    %v3126 = vpack.c.b16 %v3090, %v3089
    %v3127 = vpack.c.b16 %v3092, %v3091
    %v3128 = vpack.c.b16 %v3094, %v3093
    %v3129 = vpack.c.b16 %v3096, %v3095
    %v3130 = vpack.c.b16 %v3098, %v3097
    %v3131 = vpack.c.b16 %v3100, %v3099
    %v3132 = vpack.c.b16 %v3102, %v3101
    %v3133 = vpack.c.b16 %v3104, %v3103
    %v3134 = vpack.c.b16 %v3106, %v3105
    %v3135 = vpack.c.b16 %v3108, %v3107
    %v3136 = vpack.c.b16 %v3110, %v3109
    %v3137 = vpack.c.b16 %v3112, %v3111
    %v3138 = vpack.c.b16 %v3114, %v3113
    %3163 = vmatprep.subr.bf16.mxu0 0
    %3164 = vmatpush1.bf16.msra.mxu0 %v3122
    %3165 = vmatprep.subr.bf16.mxu0 0
    %3166 = vmatpush1.bf16.msra.mxu0 %v3121
    %3167 = vmatprep.subr.bf16.mxu0 0
    %3168 = vmatpush1.bf16.msra.mxu0 %v3120
    %3169 = vmatprep.subr.bf16.mxu0 0
    %3170 = vmatpush1.bf16.msra.mxu0 %v3119
    %3171 = vmatprep.subr.bf16.mxu0 0
    %3172 = vmatpush1.bf16.msra.mxu0 %v3118
    %3173 = vmatprep.subr.bf16.mxu0 0
    %3174 = vmatpush1.bf16.msra.mxu0 %v3117
    %3175 = vmatprep.subr.bf16.mxu0 0
    %3176 = vmatpush1.bf16.msra.mxu0 %v3116
    %3177 = vmatprep.subr.bf16.mxu0 0
    %3178 = vmatpush1.bf16.msra.mxu0 %v3115
    %3179 = vmatprep.subr.bf16.mxu0 0
    %3180 = vmatpush2.bf16.msra.mxu0 %v3130
    %3181 = vmatprep.subr.bf16.mxu0 0
    %3182 = vmatpush2.bf16.msra.mxu0 %v3129
    %3183 = vmatprep.subr.bf16.mxu0 0
    %3184 = vmatpush2.bf16.msra.mxu0 %v3128
    %3185 = vmatprep.subr.bf16.mxu0 0
    %3186 = vmatpush2.bf16.msra.mxu0 %v3127
    %3187 = vmatprep.subr.bf16.mxu0 0
    %3188 = vmatpush2.bf16.msra.mxu0 %v3126
    %3189 = vmatprep.subr.bf16.mxu0 0
    %3190 = vmatpush2.bf16.msra.mxu0 %v3125
    %3191 = vmatprep.subr.bf16.mxu0 0
    %3192 = vmatpush2.bf16.msra.mxu0 %v3124
    %3193 = vmatprep.subr.bf16.mxu0 0
    %3194 = vmatpush2.bf16.msra.mxu0 %v3123
    %3195 = vmatprep.mubr.bf16.mxu0 %v2962
    %3196 = vmatmul.mubr.bf16.gmra.mxu0 %v2961
    %v3197 = vpop.f32.mrf.mxu0
    %v3198 = vadd.f32 %v3017, %v3197
    %v3199 = vpop.f32.mrf.mxu0
    %v3200 = vpop.f32.mrf.mxu0
    %v3201 = vadd.f32 %v3017, %v3200
    %v3202 = vpop.f32.mrf.mxu0
    %3203 = vdwg.mxu0
    %3204 = vmatprep.subr.bf16.mxu0 0
    %3205 = vmatpush1.bf16.msra.mxu0 %v3138
    %3206 = vmatprep.subr.bf16.mxu0 0
    %3207 = vmatpush1.bf16.msra.mxu0 %v3137
    %3208 = vmatprep.subr.bf16.mxu0 0
    %3209 = vmatpush1.bf16.msra.mxu0 %v3136
    %3210 = vmatprep.subr.bf16.mxu0 0
    %3211 = vmatpush1.bf16.msra.mxu0 %v3135
    %3212 = vmatprep.subr.bf16.mxu0 0
    %3213 = vmatpush1.bf16.msra.mxu0 %v3134
    %3214 = vmatprep.subr.bf16.mxu0 0
    %3215 = vmatpush1.bf16.msra.mxu0 %v3133
    %3216 = vmatprep.subr.bf16.mxu0 0
    %3217 = vmatpush1.bf16.msra.mxu0 %v3132
    %3218 = vmatprep.subr.bf16.mxu0 0
    %3219 = vmatpush1.bf16.msra.mxu0 %v3131
    %3220 = vmatprep.subr.bf16.mxu0 0
    %3221 = vmatpush2.bf16.msra.mxu0 0
    %3222 = vmatprep.subr.bf16.mxu0 0
    %3223 = vmatpush2.bf16.msra.mxu0 0
    %3224 = vmatprep.subr.bf16.mxu0 0
    %3225 = vmatpush2.bf16.msra.mxu0 0
    %3226 = vmatprep.subr.bf16.mxu0 0
    %3227 = vmatpush2.bf16.msra.mxu0 0
    %3228 = vmatprep.subr.bf16.mxu0 0
    %3229 = vmatpush2.bf16.msra.mxu0 0
    %3230 = vmatprep.subr.bf16.mxu0 0
    %3231 = vmatpush2.bf16.msra.mxu0 0
    %3232 = vmatprep.subr.bf16.mxu0 0
    %3233 = vmatpush2.bf16.msra.mxu0 0
    %3234 = vmatprep.subr.bf16.mxu0 0
    %3235 = vmatpush2.bf16.msra.mxu0 0
    %3236 = vmatprep.mubr.bf16.mxu0 0
    %3237 = vmatmul.mubr.bf16.gmra.mxu0 %v2963
    %v3238 = vpop.f32.mrf.mxu0
    %v3239 = vadd.f32 %v3198, %v3238
    %v3240 = vpop.f32.mrf.mxu0
    %v3241 = vpop.f32.mrf.mxu0
    %v3242 = vadd.f32 %v3201, %v3241
    %v3243 = vpop.f32.mrf.mxu0
    %3244 = vdwg.mxu0
    %v3245 = vtanh.pop %v3239
    %v3246 = vtanh.pop %v3242
    %3247 = vst [vmem:[#allocation7] sm:$0xff] %v3245
    %3248 = vst [vmem:[#allocation7 + $0x8] sm:$0xff] %v3246
    // Predicated region
    $region38: #{actor_dense_forward.1} parent=1 // pred_check
      _
    $region39: #{actor_dense_forward.1} parent=1 // pred_check_branch
      %3250 = sbr.rel (0) target = $region41
    $region40: #{actor_dense_forward.1} parent=1 // pred_region
      %s3252 = ssub.s32 256, 32
      %3253 = vsyncadd [#allocation4], %s3252
      %s3254 = sshll.u32 [#allocation7], 4
      %s3255 = int_to_ptr.vmem [resolvable:$true] %s3254
      %3260 = dma.vmem_to_hbm [thread:$0]  %s3255, 32, %s7, [#allocation4], 32, 32, 2
    $region41: #{actor_dense_forward.1} parent=1 // pred_fallthru
      _
    // Predicated region
    $region42: #{actor_dense_forward.1} parent=1 // pred_check
      _
    $region43: #{actor_dense_forward.1} parent=1 // pred_check_branch
      %3262 = sbr.rel (0) target = $region45
    $region44: #{actor_dense_forward.1} parent=1 // pred_region
      %3263 = dma.done [#allocation4], 256
    $region45: #{actor_dense_forward.1} parent=1 // pred_fallthru
      _
    %3264 = vsyncpa [#allocation3], 1
    %3265 = vsyncpa [#allocation6], 1
    %3266 = vsyncpa [#allocation4], 1

</llo_original>
